<compile_context>
chip_gen: v7x
topology: tpu7x:2x2x1
jax: 0.10.0
libtpu: 0.0.40
codegen_flags: <defaults>
</compile_context>

<pallas_src>
import functools

import jax
import jax.numpy as jnp
from jax.experimental import pallas as pl
from jax.experimental.pallas import tpu as pltpu


def _round_up(x, m):
    return (x + m - 1) // m * m


# ----------------------------- Pallas kernel -------------------------------

def _fused_lstm_encoder_kernel(n_layers, seq_len, b_pad, hid_dim, *refs):
    """All LSTM layers over the full sequence in one kernel invocation.

    refs (n_layers > 1):
      x_ref:        (T*Bp, E)            bf16  embedded input, time-major rows
      wih0_ref:     (E, 4H)              bf16  layer-0 input->gates weights (transposed)
      wih_rest_ref: (L-1, H, 4H)         bf16  layer>=1 input->gates weights
      whh_ref:      (L, H, 4H)           bf16  hidden->gates weights (transposed)
      b_ref:        (L, 1, 4H)           f32   b_ih + b_hh per layer
      out_ref:      (T*Bp, H)            f32   last-layer h_t for all t (dense slab)
      hid_ref:      (L, Bp, H)           f32   final hidden state per layer
      cell_ref:     (L, Bp, H)           f32   final cell state per layer
      act_scr:      (T*Bp, H)            bf16  inter-layer activation sequence (VMEM)
      g_scr:        (T*Bp, 4H)           bf16  hoisted input-projection gates (VMEM)
    For n_layers == 1 the wih_rest_ref argument is absent.
    """
    if n_layers > 1:
        (x_ref, wih0_ref, wih_rest_ref, whh_ref, b_ref,
         out_ref, hid_ref, cell_ref, act_scr, g_scr) = refs
    else:
        (x_ref, wih0_ref, whh_ref, b_ref,
         out_ref, hid_ref, cell_ref, act_scr, g_scr) = refs
        wih_rest_ref = None

    H = hid_dim
    last = n_layers - 1

    for layer in range(n_layers):
        # ---- hoisted input projection: one bulk MXU matmul per layer -------
        if layer == 0:
            x_in = x_ref[...]                                  # (T*Bp, E)  bf16
            w_in = wih0_ref[...]                               # (E, 4H)    bf16
        else:
            x_in = act_scr[...]                                # (T*Bp, H)  bf16 (no cast pass)
            w_in = wih_rest_ref[layer - 1]                     # (H, 4H)    bf16
        # Bias is NOT baked in here (kept f32 per-step) so the bf16 store of
        # the slab does not round the bias contribution twice.
        g_scr[...] = jnp.dot(
            x_in, w_in, preferred_element_type=jnp.float32
        ).astype(jnp.bfloat16)                                 # (T*Bp, 4H) bf16

        w_hh = whh_ref[layer]                                  # (H, 4H) bf16, VMEM-resident
        bias = b_ref[layer]                                    # (1, 4H) f32

        h = jnp.zeros((b_pad, H), jnp.float32)
        c = jnp.zeros((b_pad, H), jnp.float32)

        # Time recurrence.  seq_len is static and small here, so a fully
        # unrolled loop gives the scheduler the whole recurrence.
        # TODO(synk): for T >~ 16 switch to lax.fori_loop(..., unroll=4..8)
        # with pl.ds(t * b_pad, b_pad) row slices to bound code size.
        for t in range(seq_len):
            row = t * b_pad                                    # static, 16-aligned
            gates = (jnp.dot(h.astype(jnp.bfloat16), w_hh,
                             preferred_element_type=jnp.float32)
                     + g_scr[row:row + b_pad, :].astype(jnp.float32)
                     + bias)                                   # (Bp, 4H) f32
            # PyTorch gate order: input, forget, cell (g), output.
            # NOTE: at real model sizes keep H a multiple of 128 so these lane
            # slices are tile-aligned (free); at H=32 each costs a lane select.
            i_g = jax.nn.sigmoid(gates[:, 0 * H:1 * H])
            f_g = jax.nn.sigmoid(gates[:, 1 * H:2 * H])
            g_g = jnp.tanh(gates[:, 2 * H:3 * H])
            o_g = jax.nn.sigmoid(gates[:, 3 * H:4 * H])
            c = f_g * c + i_g * g_g
            h = o_g * jnp.tanh(c)
            if layer == last:
                out_ref[row:row + b_pad, :] = h                # direct HBM slab write
            else:
                act_scr[row:row + b_pad, :] = h.astype(jnp.bfloat16)   # stays in VMEM

        hid_ref[layer] = h
        cell_ref[layer] = c


# ----------------------------- kernel wrapper --------------------------------

def lstm_encoder(x_tbe, params, n_layers):
    """x_tbe: (T, B, E) float32, time-major.

    Returns (out_seq (T, B, H), hidden (L, B, H), cell (L, B, H))."""
    T, B, E = x_tbe.shape
    H = params["w_hh_0"].shape[1]
    L = n_layers
    # 16 = bf16 sublane packing (2 rows/sublane x 8 sublanes): every per-step
    # row block of the bf16 scratch slabs is then natively tile-aligned.
    Bp = _round_up(max(B, 8), 16)

    x_pad = jnp.pad(x_tbe, ((0, 0), (0, Bp - B), (0, 0)))           # (T, Bp, E)
    x2d = x_pad.reshape(T * Bp, E).astype(jnp.bfloat16)             # time-major rows

    # Weights transposed to (in_dim, 4H) so the in-kernel dots are plain
    # row-major matmuls; bf16 operands feed the MXU, accumulation stays f32.
    wih0 = jnp.transpose(params["w_ih_0"]).astype(jnp.bfloat16)     # (E, 4H)
    whh = jnp.stack(
        [jnp.transpose(params[f"w_hh_{l}"]) for l in range(L)]
    ).astype(jnp.bfloat16)                                          # (L, H, 4H)
    bias = jnp.stack(
        [(params[f"b_ih_{l}"] + params[f"b_hh_{l}"]).reshape(1, 4 * H)
         for l in range(L)]).astype(jnp.float32)                    # (L, 1, 4H)

    args = [x2d, wih0]
    if L > 1:
        wih_rest = jnp.stack(
            [jnp.transpose(params[f"w_ih_{l}"]) for l in range(1, L)]
        ).astype(jnp.bfloat16)                                      # (L-1, H, 4H)
        args.append(wih_rest)
    args += [whh, bias]

    kernel = functools.partial(_fused_lstm_encoder_kernel, L, T, Bp, H)
    vmem = pl.BlockSpec(memory_space=pltpu.MemorySpace.VMEM)

    # Advisory cost hint so XLA schedules the surrounding gather/transposes
    # sensibly around this long-running custom call.
    flops = (2 * (T * Bp) * E * 4 * H                  # layer-0 bulk projection
             + 2 * (T * Bp) * H * 4 * H * (L - 1)      # layer>=1 bulk projections
             + 2 * T * Bp * H * 4 * H * L)             # recurrent matmuls
    transcendentals = 5 * T * Bp * H * L               # 4 gates + tanh(c) per elem
    bytes_accessed = (x2d.size * 2 + wih0.size * 2 + whh.size * 2 + bias.size * 4
                      + (T * Bp * H) * 4 + 2 * L * Bp * H * 4
                      + ((L - 1) * H * 4 * H * 2 if L > 1 else 0))

    out2d, hidden, cell = pl.pallas_call(
        kernel,
        out_shape=(
            jax.ShapeDtypeStruct((T * Bp, H), jnp.float32),   # last-layer h sequence
            jax.ShapeDtypeStruct((L, Bp, H), jnp.float32),    # final hidden per layer
            jax.ShapeDtypeStruct((L, Bp, H), jnp.float32),    # final cell per layer
        ),
        in_specs=[vmem] * len(args),
        out_specs=(vmem, vmem, vmem),
        scratch_shapes=[
            pltpu.VMEM((T * Bp, H), jnp.bfloat16),        # inter-layer activations
            pltpu.VMEM((T * Bp, 4 * H), jnp.bfloat16),    # hoisted gate pre-activations
        ],
        # Single invocation: no per-timestep grid steps, weights land in VMEM
        # exactly once.  Explicit VMEM budget keeps the same kernel inside
        # v7x's 64 MiB physical VMEM.
        compiler_params=pltpu.CompilerParams(vmem_limit_bytes=32 * 1024 * 1024),
        cost_estimate=pl.CostEstimate(flops=flops,
                                      transcendentals=transcendentals,
                                      bytes_accessed=bytes_accessed),
        # TODO(synk): at real sizes on v7x, stream per-layer weights via
        # pl.ANY + pltpu.make_async_copy, time-chunk with a grid for long T,
        # and shard the padded batch across the two TensorCores.
    )(*args)

    out_seq = out2d.reshape(T, Bp, H)[:, :B, :]
    # Padded rows (B..Bp) of hidden/cell contain bias-driven garbage; slice off.
    return out_seq, hidden[:, :B, :], cell[:, :B, :]


# ----------------------------- Encoder glue --------------------------------

def init_encoder_params(key, input_dim, emb_dim, hid_dim, n_layers):
    """Deterministic parameter init matching the PyTorch module's shapes."""
    params = {}
    k_emb, key = jax.random.split(key)
    params["embedding"] = jax.random.normal(
        k_emb, (input_dim, emb_dim), jnp.float32)          # nn.Embedding weight

    bound = 1.0 / jnp.sqrt(jnp.float32(hid_dim))
    for layer in range(n_layers):
        in_dim = emb_dim if layer == 0 else hid_dim
        k1, k2, k3, k4, key = jax.random.split(key, 5)
        params[f"w_ih_{layer}"] = jax.random.uniform(
            k1, (4 * hid_dim, in_dim), jnp.float32, -bound, bound)
        params[f"w_hh_{layer}"] = jax.random.uniform(
            k2, (4 * hid_dim, hid_dim), jnp.float32, -bound, bound)
        params[f"b_ih_{layer}"] = jax.random.uniform(
            k3, (4 * hid_dim,), jnp.float32, -bound, bound)
        params[f"b_hh_{layer}"] = jax.random.uniform(
            k4, (4 * hid_dim,), jnp.float32, -bound, bound)
    return params


@functools.partial(jax.jit, static_argnames=("n_layers",))
def encoder_forward(params, src, n_layers):
    """src: (B, T) int32 token ids -> (output (B,T,H), hidden (L,B,H), cell (L,B,H))."""
    embedded = jnp.take(params["embedding"], src, axis=0)    # (B, T, E) gather (glue)
    # Dropout: identity in eval/inference mode.
    x = jnp.transpose(embedded, (1, 0, 2))                   # (T, B, E) time-major
    out_seq, hidden, cell = lstm_encoder(x, params, n_layers)
    output = jnp.transpose(out_seq, (1, 0, 2))               # (B, T, H) batch_first
    return output, hidden, cell


def _reference_encoder(params, src, n_layers):
    """Pure-JAX f32 reference implementing the same encoder forward."""
    emb = jnp.take(params["embedding"], src, axis=0)         # (B, T, E)
    x = jnp.transpose(emb, (1, 0, 2))                        # (T, B, E)
    T, B, _ = x.shape
    H = params["w_hh_0"].shape[1]
    hiddens, cells = [], []
    for l in range(n_layers):
        w_ih = params[f"w_ih_{l}"]
        w_hh = params[f"w_hh_{l}"]
        b = params[f"b_ih_{l}"] + params[f"b_hh_{l}"]
        h = jnp.zeros((B, H), jnp.float32)
        c = jnp.zeros((B, H), jnp.float32)
        outs = []
        for t in range(T):
            gates = x[t] @ w_ih.T + h @ w_hh.T + b
            i_g = jax.nn.sigmoid(gates[:, :H])
            f_g = jax.nn.sigmoid(gates[:, H:2 * H])
            g_g = jnp.tanh(gates[:, 2 * H:3 * H])
            o_g = jax.nn.sigmoid(gates[:, 3 * H:])
            c = f_g * c + i_g * g_g
            h = o_g * jnp.tanh(c)
            outs.append(h)
        x = jnp.stack(outs, axis=0)
        hiddens.append(h)
        cells.append(c)
    return (jnp.transpose(x, (1, 0, 2)),
            jnp.stack(hiddens, axis=0),
            jnp.stack(cells, axis=0))


# --------------------------------- main -------------------------------------

if __name__ == "__main__":
    INPUT_DIM = 16    # vocab size
    EMB_DIM = 32
    HID_DIM = 32
    N_LAYERS = 2
    BATCH = 2
    SEQ = 8

    key = jax.random.PRNGKey(0)
    k_params, k_src = jax.random.split(key)

    params = init_encoder_params(k_params, INPUT_DIM, EMB_DIM, HID_DIM, N_LAYERS)
    src = jax.random.randint(k_src, (BATCH, SEQ), 0, INPUT_DIM, dtype=jnp.int32)

    output, hidden, cell = encoder_forward(params, src, N_LAYERS)
    jax.block_until_ready((output, hidden, cell))

    assert output.shape == (BATCH, SEQ, HID_DIM)
    assert hidden.shape == (N_LAYERS, BATCH, HID_DIM)
    assert cell.shape == (N_LAYERS, BATCH, HID_DIM)

    # Correctness vs. pure-JAX f32 reference (kernel matmul operands and the
    # hoisted gate slab are bf16, so allow a loose tolerance).
    ref_out, ref_hid, ref_cell = _reference_encoder(params, src, N_LAYERS)
    tol = 1e-1
    assert float(jnp.max(jnp.abs(output - ref_out))) < tol
    assert float(jnp.max(jnp.abs(hidden - ref_hid))) < tol
    assert float(jnp.max(jnp.abs(cell - ref_cell))) < tol

    print("KERNEL_OK")
</pallas_src>

<mosaic_0001>
module attributes {stable_mosaic.version = 11 : i64} {
  func.func @_fused_lstm_encoder_kernel(%arg0: memref<128x32xbf16, #tpu.memory_space<vmem>>, %arg1: memref<32x128xbf16, #tpu.memory_space<vmem>>, %arg2: memref<1x32x128xbf16, #tpu.memory_space<vmem>>, %arg3: memref<2x32x128xbf16, #tpu.memory_space<vmem>>, %arg4: memref<2x1x128xf32, #tpu.memory_space<vmem>>, %arg5: memref<128x32xf32, #tpu.memory_space<vmem>>, %arg6: memref<2x16x32xf32, #tpu.memory_space<vmem>>, %arg7: memref<2x16x32xf32, #tpu.memory_space<vmem>>, %arg8: memref<128x32xbf16, #tpu.memory_space<vmem>>, %arg9: memref<128x128xbf16, #tpu.memory_space<vmem>>) attributes {dimension_semantics = [], scalar_prefetch = 0 : i64, scratch_operands = 2 : i64, tpu.core_type = #tpu.core_type<tc>} {
    %c0 = arith.constant 0 : index
    %c0_0 = arith.constant 0 : index
    %0 = vector.load %arg0[%c0, %c0_0] : memref<128x32xbf16, #tpu.memory_space<vmem>>, vector<128x32xbf16>
    %c0_1 = arith.constant 0 : index
    %c0_2 = arith.constant 0 : index
    %1 = vector.load %arg1[%c0_1, %c0_2] : memref<32x128xbf16, #tpu.memory_space<vmem>>, vector<32x128xbf16>
    %cst = arith.constant dense<0.000000e+00> : vector<128x128xf32>
    %2 = tpu.matmul %0, %1, %cst {dimension_numbers = #tpu.dot_dimension_numbers<[1], [0], [0], [1], [0, 0, 1, 1], [], []>} : vector<128x32xbf16>, vector<32x128xbf16>, vector<128x128xf32> -> vector<128x128xf32>
    %3 = arith.truncf %2 : vector<128x128xf32> to vector<128x128xbf16>
    %c0_3 = arith.constant 0 : index
    %c0_4 = arith.constant 0 : index
    %4 = vector.load %arg9[%c0_3, %c0_4] : memref<128x128xbf16, #tpu.memory_space<vmem>>, vector<128x128xbf16>
    tpu.vector_store %arg9[%c0_3, %c0_4], %3 {strides = array<i32>} : memref<128x128xbf16, #tpu.memory_space<vmem>>, vector<128x128xbf16>,
    %c0_5 = arith.constant 0 : index
    %c0_6 = arith.constant 0 : index
    %c0_7 = arith.constant 0 : index
    %5 = vector.load %arg3[%c0_5, %c0_6, %c0_7] : memref<2x32x128xbf16, #tpu.memory_space<vmem>>, vector<1x32x128xbf16>
    %6 = vector.shape_cast %5 : vector<1x32x128xbf16> to vector<32x128xbf16>
    %c0_8 = arith.constant 0 : index
    %c0_9 = arith.constant 0 : index
    %c0_10 = arith.constant 0 : index
    %7 = vector.load %arg4[%c0_8, %c0_9, %c0_10] : memref<2x1x128xf32, #tpu.memory_space<vmem>>, vector<1x1x128xf32>
    %8 = vector.shape_cast %7 : vector<1x1x128xf32> to vector<1x128xf32>
    %cst_11 = arith.constant 0.000000e+00 : f32
    %9 = vector.broadcast %cst_11 : f32 to vector<16x32xf32>
    %cst_12 = arith.constant 0.000000e+00 : f32
    %10 = vector.broadcast %cst_12 : f32 to vector<16x32xf32>
    %11 = arith.truncf %9 : vector<16x32xf32> to vector<16x32xbf16>
    %cst_13 = arith.constant dense<0.000000e+00> : vector<16x128xf32>
    %12 = tpu.matmul %11, %6, %cst_13 {dimension_numbers = #tpu.dot_dimension_numbers<[1], [0], [0], [1], [0, 0, 1, 1], [], []>} : vector<16x32xbf16>, vector<32x128xbf16>, vector<16x128xf32> -> vector<16x128xf32>
    %c0_14 = arith.constant 0 : index
    %c0_15 = arith.constant 0 : index
    %13 = vector.load %arg9[%c0_14, %c0_15] : memref<128x128xbf16, #tpu.memory_space<vmem>>, vector<16x128xbf16>
    %14 = arith.extf %13 : vector<16x128xbf16> to vector<16x128xf32>
    %15 = arith.addf %12, %14 : vector<16x128xf32>
    %16 = vector.broadcast %8 : vector<1x128xf32> to vector<16x128xf32>
    %17 = arith.addf %15, %16 : vector<16x128xf32>
    %18 = vector.extract_strided_slice %17 {offsets = [0, 0], sizes = [16, 32], strides = [1, 1]} : vector<16x128xf32> to vector<16x32xf32>
    %19 = arith.negf %18 : vector<16x32xf32>
    %20 = math.exp %19 : vector<16x32xf32>
    %cst_16 = arith.constant 1.000000e+00 : f32
    %21 = vector.broadcast %cst_16 : f32 to vector<16x32xf32>
    %22 = arith.addf %21, %20 : vector<16x32xf32>
    %23 = arith.divf %21, %22 : vector<16x32xf32>
    %24 = vector.extract_strided_slice %17 {offsets = [0, 32], sizes = [16, 32], strides = [1, 1]} : vector<16x128xf32> to vector<16x32xf32>
    %25 = arith.negf %24 : vector<16x32xf32>
    %26 = math.exp %25 : vector<16x32xf32>
    %cst_17 = arith.constant 1.000000e+00 : f32
    %27 = vector.broadcast %cst_17 : f32 to vector<16x32xf32>
    %28 = arith.addf %27, %26 : vector<16x32xf32>
    %29 = arith.divf %27, %28 : vector<16x32xf32>
    %30 = vector.extract_strided_slice %17 {offsets = [0, 64], sizes = [16, 32], strides = [1, 1]} : vector<16x128xf32> to vector<16x32xf32>
    %31 = math.tanh %30 : vector<16x32xf32>
    %32 = vector.extract_strided_slice %17 {offsets = [0, 96], sizes = [16, 32], strides = [1, 1]} : vector<16x128xf32> to vector<16x32xf32>
    %33 = arith.negf %32 : vector<16x32xf32>
    %34 = math.exp %33 : vector<16x32xf32>
    %cst_18 = arith.constant 1.000000e+00 : f32
    %35 = vector.broadcast %cst_18 : f32 to vector<16x32xf32>
    %36 = arith.addf %35, %34 : vector<16x32xf32>
    %37 = arith.divf %35, %36 : vector<16x32xf32>
    %38 = arith.mulf %29, %10 : vector<16x32xf32>
    %39 = arith.mulf %23, %31 : vector<16x32xf32>
    %40 = arith.addf %38, %39 : vector<16x32xf32>
    %41 = math.tanh %40 : vector<16x32xf32>
    %42 = arith.mulf %37, %41 : vector<16x32xf32>
    %43 = arith.truncf %42 : vector<16x32xf32> to vector<16x32xbf16>
    %c0_19 = arith.constant 0 : index
    %c0_20 = arith.constant 0 : index
    %44 = vector.load %arg8[%c0_19, %c0_20] : memref<128x32xbf16, #tpu.memory_space<vmem>>, vector<16x32xbf16>
    tpu.vector_store %arg8[%c0_19, %c0_20], %43 {strides = array<i32>} : memref<128x32xbf16, #tpu.memory_space<vmem>>, vector<16x32xbf16>,
    %45 = arith.truncf %42 : vector<16x32xf32> to vector<16x32xbf16>
    %cst_21 = arith.constant dense<0.000000e+00> : vector<16x128xf32>
    %46 = tpu.matmul %45, %6, %cst_21 {dimension_numbers = #tpu.dot_dimension_numbers<[1], [0], [0], [1], [0, 0, 1, 1], [], []>} : vector<16x32xbf16>, vector<32x128xbf16>, vector<16x128xf32> -> vector<16x128xf32>
    %c16 = arith.constant 16 : index
    %c0_22 = arith.constant 0 : index
    %47 = vector.load %arg9[%c16, %c0_22] : memref<128x128xbf16, #tpu.memory_space<vmem>>, vector<16x128xbf16>
    %48 = arith.extf %47 : vector<16x128xbf16> to vector<16x128xf32>
    %49 = arith.addf %46, %48 : vector<16x128xf32>
    %50 = vector.broadcast %8 : vector<1x128xf32> to vector<16x128xf32>
    %51 = arith.addf %49, %50 : vector<16x128xf32>
    %52 = vector.extract_strided_slice %51 {offsets = [0, 0], sizes = [16, 32], strides = [1, 1]} : vector<16x128xf32> to vector<16x32xf32>
    %53 = arith.negf %52 : vector<16x32xf32>
    %54 = math.exp %53 : vector<16x32xf32>
    %cst_23 = arith.constant 1.000000e+00 : f32
    %55 = vector.broadcast %cst_23 : f32 to vector<16x32xf32>
    %56 = arith.addf %55, %54 : vector<16x32xf32>
    %57 = arith.divf %55, %56 : vector<16x32xf32>
    %58 = vector.extract_strided_slice %51 {offsets = [0, 32], sizes = [16, 32], strides = [1, 1]} : vector<16x128xf32> to vector<16x32xf32>
    %59 = arith.negf %58 : vector<16x32xf32>
    %60 = math.exp %59 : vector<16x32xf32>
    %cst_24 = arith.constant 1.000000e+00 : f32
    %61 = vector.broadcast %cst_24 : f32 to vector<16x32xf32>
    %62 = arith.addf %61, %60 : vector<16x32xf32>
    %63 = arith.divf %61, %62 : vector<16x32xf32>
    %64 = vector.extract_strided_slice %51 {offsets = [0, 64], sizes = [16, 32], strides = [1, 1]} : vector<16x128xf32> to vector<16x32xf32>
    %65 = math.tanh %64 : vector<16x32xf32>
    %66 = vector.extract_strided_slice %51 {offsets = [0, 96], sizes = [16, 32], strides = [1, 1]} : vector<16x128xf32> to vector<16x32xf32>
    %67 = arith.negf %66 : vector<16x32xf32>
    %68 = math.exp %67 : vector<16x32xf32>
    %cst_25 = arith.constant 1.000000e+00 : f32
    %69 = vector.broadcast %cst_25 : f32 to vector<16x32xf32>
    %70 = arith.addf %69, %68 : vector<16x32xf32>
    %71 = arith.divf %69, %70 : vector<16x32xf32>
    %72 = arith.mulf %63, %40 : vector<16x32xf32>
    %73 = arith.mulf %57, %65 : vector<16x32xf32>
    %74 = arith.addf %72, %73 : vector<16x32xf32>
    %75 = math.tanh %74 : vector<16x32xf32>
    %76 = arith.mulf %71, %75 : vector<16x32xf32>
    %77 = arith.truncf %76 : vector<16x32xf32> to vector<16x32xbf16>
    %c16_26 = arith.constant 16 : index
    %c0_27 = arith.constant 0 : index
    %78 = vector.load %arg8[%c16_26, %c0_27] : memref<128x32xbf16, #tpu.memory_space<vmem>>, vector<16x32xbf16>
    tpu.vector_store %arg8[%c16_26, %c0_27], %77 {strides = array<i32>} : memref<128x32xbf16, #tpu.memory_space<vmem>>, vector<16x32xbf16>,
    %79 = arith.truncf %76 : vector<16x32xf32> to vector<16x32xbf16>
    %cst_28 = arith.constant dense<0.000000e+00> : vector<16x128xf32>
    %80 = tpu.matmul %79, %6, %cst_28 {dimension_numbers = #tpu.dot_dimension_numbers<[1], [0], [0], [1], [0, 0, 1, 1], [], []>} : vector<16x32xbf16>, vector<32x128xbf16>, vector<16x128xf32> -> vector<16x128xf32>
    %c32 = arith.constant 32 : index
    %c0_29 = arith.constant 0 : index
    %81 = vector.load %arg9[%c32, %c0_29] : memref<128x128xbf16, #tpu.memory_space<vmem>>, vector<16x128xbf16>
    %82 = arith.extf %81 : vector<16x128xbf16> to vector<16x128xf32>
    %83 = arith.addf %80, %82 : vector<16x128xf32>
    %84 = vector.broadcast %8 : vector<1x128xf32> to vector<16x128xf32>
    %85 = arith.addf %83, %84 : vector<16x128xf32>
    %86 = vector.extract_strided_slice %85 {offsets = [0, 0], sizes = [16, 32], strides = [1, 1]} : vector<16x128xf32> to vector<16x32xf32>
    %87 = arith.negf %86 : vector<16x32xf32>
    %88 = math.exp %87 : vector<16x32xf32>
    %cst_30 = arith.constant 1.000000e+00 : f32
    %89 = vector.broadcast %cst_30 : f32 to vector<16x32xf32>
    %90 = arith.addf %89, %88 : vector<16x32xf32>
    %91 = arith.divf %89, %90 : vector<16x32xf32>
    %92 = vector.extract_strided_slice %85 {offsets = [0, 32], sizes = [16, 32], strides = [1, 1]} : vector<16x128xf32> to vector<16x32xf32>
    %93 = arith.negf %92 : vector<16x32xf32>
    %94 = math.exp %93 : vector<16x32xf32>
    %cst_31 = arith.constant 1.000000e+00 : f32
    %95 = vector.broadcast %cst_31 : f32 to vector<16x32xf32>
    %96 = arith.addf %95, %94 : vector<16x32xf32>
    %97 = arith.divf %95, %96 : vector<16x32xf32>
    %98 = vector.extract_strided_slice %85 {offsets = [0, 64], sizes = [16, 32], strides = [1, 1]} : vector<16x128xf32> to vector<16x32xf32>
    %99 = math.tanh %98 : vector<16x32xf32>
    %100 = vector.extract_strided_slice %85 {offsets = [0, 96], sizes = [16, 32], strides = [1, 1]} : vector<16x128xf32> to vector<16x32xf32>
    %101 = arith.negf %100 : vector<16x32xf32>
    %102 = math.exp %101 : vector<16x32xf32>
    %cst_32 = arith.constant 1.000000e+00 : f32
    %103 = vector.broadcast %cst_32 : f32 to vector<16x32xf32>
    %104 = arith.addf %103, %102 : vector<16x32xf32>
    %105 = arith.divf %103, %104 : vector<16x32xf32>
    %106 = arith.mulf %97, %74 : vector<16x32xf32>
    %107 = arith.mulf %91, %99 : vector<16x32xf32>
    %108 = arith.addf %106, %107 : vector<16x32xf32>
    %109 = math.tanh %108 : vector<16x32xf32>
    %110 = arith.mulf %105, %109 : vector<16x32xf32>
    %111 = arith.truncf %110 : vector<16x32xf32> to vector<16x32xbf16>
    %c32_33 = arith.constant 32 : index
    %c0_34 = arith.constant 0 : index
    %112 = vector.load %arg8[%c32_33, %c0_34] : memref<128x32xbf16, #tpu.memory_space<vmem>>, vector<16x32xbf16>
    tpu.vector_store %arg8[%c32_33, %c0_34], %111 {strides = array<i32>} : memref<128x32xbf16, #tpu.memory_space<vmem>>, vector<16x32xbf16>,
    %113 = arith.truncf %110 : vector<16x32xf32> to vector<16x32xbf16>
    %cst_35 = arith.constant dense<0.000000e+00> : vector<16x128xf32>
    %114 = tpu.matmul %113, %6, %cst_35 {dimension_numbers = #tpu.dot_dimension_numbers<[1], [0], [0], [1], [0, 0, 1, 1], [], []>} : vector<16x32xbf16>, vector<32x128xbf16>, vector<16x128xf32> -> vector<16x128xf32>
    %c48 = arith.constant 48 : index
    %c0_36 = arith.constant 0 : index
    %115 = vector.load %arg9[%c48, %c0_36] : memref<128x128xbf16, #tpu.memory_space<vmem>>, vector<16x128xbf16>
    %116 = arith.extf %115 : vector<16x128xbf16> to vector<16x128xf32>
    %117 = arith.addf %114, %116 : vector<16x128xf32>
    %118 = vector.broadcast %8 : vector<1x128xf32> to vector<16x128xf32>
    %119 = arith.addf %117, %118 : vector<16x128xf32>
    %120 = vector.extract_strided_slice %119 {offsets = [0, 0], sizes = [16, 32], strides = [1, 1]} : vector<16x128xf32> to vector<16x32xf32>
    %121 = arith.negf %120 : vector<16x32xf32>
    %122 = math.exp %121 : vector<16x32xf32>
    %cst_37 = arith.constant 1.000000e+00 : f32
    %123 = vector.broadcast %cst_37 : f32 to vector<16x32xf32>
    %124 = arith.addf %123, %122 : vector<16x32xf32>
    %125 = arith.divf %123, %124 : vector<16x32xf32>
    %126 = vector.extract_strided_slice %119 {offsets = [0, 32], sizes = [16, 32], strides = [1, 1]} : vector<16x128xf32> to vector<16x32xf32>
    %127 = arith.negf %126 : vector<16x32xf32>
    %128 = math.exp %127 : vector<16x32xf32>
    %cst_38 = arith.constant 1.000000e+00 : f32
    %129 = vector.broadcast %cst_38 : f32 to vector<16x32xf32>
    %130 = arith.addf %129, %128 : vector<16x32xf32>
    %131 = arith.divf %129, %130 : vector<16x32xf32>
    %132 = vector.extract_strided_slice %119 {offsets = [0, 64], sizes = [16, 32], strides = [1, 1]} : vector<16x128xf32> to vector<16x32xf32>
    %133 = math.tanh %132 : vector<16x32xf32>
    %134 = vector.extract_strided_slice %119 {offsets = [0, 96], sizes = [16, 32], strides = [1, 1]} : vector<16x128xf32> to vector<16x32xf32>
    %135 = arith.negf %134 : vector<16x32xf32>
    %136 = math.exp %135 : vector<16x32xf32>
    %cst_39 = arith.constant 1.000000e+00 : f32
    %137 = vector.broadcast %cst_39 : f32 to vector<16x32xf32>
    %138 = arith.addf %137, %136 : vector<16x32xf32>
    %139 = arith.divf %137, %138 : vector<16x32xf32>
    %140 = arith.mulf %131, %108 : vector<16x32xf32>
    %141 = arith.mulf %125, %133 : vector<16x32xf32>
    %142 = arith.addf %140, %141 : vector<16x32xf32>
    %143 = math.tanh %142 : vector<16x32xf32>
    %144 = arith.mulf %139, %143 : vector<16x32xf32>
    %145 = arith.truncf %144 : vector<16x32xf32> to vector<16x32xbf16>
    %c48_40 = arith.constant 48 : index
    %c0_41 = arith.constant 0 : index
    %146 = vector.load %arg8[%c48_40, %c0_41] : memref<128x32xbf16, #tpu.memory_space<vmem>>, vector<16x32xbf16>
    tpu.vector_store %arg8[%c48_40, %c0_41], %145 {strides = array<i32>} : memref<128x32xbf16, #tpu.memory_space<vmem>>, vector<16x32xbf16>,
    %147 = arith.truncf %144 : vector<16x32xf32> to vector<16x32xbf16>
    %cst_42 = arith.constant dense<0.000000e+00> : vector<16x128xf32>
    %148 = tpu.matmul %147, %6, %cst_42 {dimension_numbers = #tpu.dot_dimension_numbers<[1], [0], [0], [1], [0, 0, 1, 1], [], []>} : vector<16x32xbf16>, vector<32x128xbf16>, vector<16x128xf32> -> vector<16x128xf32>
    %c64 = arith.constant 64 : index
    %c0_43 = arith.constant 0 : index
    %149 = vector.load %arg9[%c64, %c0_43] : memref<128x128xbf16, #tpu.memory_space<vmem>>, vector<16x128xbf16>
    %150 = arith.extf %149 : vector<16x128xbf16> to vector<16x128xf32>
    %151 = arith.addf %148, %150 : vector<16x128xf32>
    %152 = vector.broadcast %8 : vector<1x128xf32> to vector<16x128xf32>
    %153 = arith.addf %151, %152 : vector<16x128xf32>
    %154 = vector.extract_strided_slice %153 {offsets = [0, 0], sizes = [16, 32], strides = [1, 1]} : vector<16x128xf32> to vector<16x32xf32>
    %155 = arith.negf %154 : vector<16x32xf32>
    %156 = math.exp %155 : vector<16x32xf32>
    %cst_44 = arith.constant 1.000000e+00 : f32
    %157 = vector.broadcast %cst_44 : f32 to vector<16x32xf32>
    %158 = arith.addf %157, %156 : vector<16x32xf32>
    %159 = arith.divf %157, %158 : vector<16x32xf32>
    %160 = vector.extract_strided_slice %153 {offsets = [0, 32], sizes = [16, 32], strides = [1, 1]} : vector<16x128xf32> to vector<16x32xf32>
    %161 = arith.negf %160 : vector<16x32xf32>
    %162 = math.exp %161 : vector<16x32xf32>
    %cst_45 = arith.constant 1.000000e+00 : f32
    %163 = vector.broadcast %cst_45 : f32 to vector<16x32xf32>
    %164 = arith.addf %163, %162 : vector<16x32xf32>
    %165 = arith.divf %163, %164 : vector<16x32xf32>
    %166 = vector.extract_strided_slice %153 {offsets = [0, 64], sizes = [16, 32], strides = [1, 1]} : vector<16x128xf32> to vector<16x32xf32>
    %167 = math.tanh %166 : vector<16x32xf32>
    %168 = vector.extract_strided_slice %153 {offsets = [0, 96], sizes = [16, 32], strides = [1, 1]} : vector<16x128xf32> to vector<16x32xf32>
    %169 = arith.negf %168 : vector<16x32xf32>
    %170 = math.exp %169 : vector<16x32xf32>
    %cst_46 = arith.constant 1.000000e+00 : f32
    %171 = vector.broadcast %cst_46 : f32 to vector<16x32xf32>
    %172 = arith.addf %171, %170 : vector<16x32xf32>
    %173 = arith.divf %171, %172 : vector<16x32xf32>
    %174 = arith.mulf %165, %142 : vector<16x32xf32>
    %175 = arith.mulf %159, %167 : vector<16x32xf32>
    %176 = arith.addf %174, %175 : vector<16x32xf32>
    %177 = math.tanh %176 : vector<16x32xf32>
    %178 = arith.mulf %173, %177 : vector<16x32xf32>
    %179 = arith.truncf %178 : vector<16x32xf32> to vector<16x32xbf16>
    %c64_47 = arith.constant 64 : index
    %c0_48 = arith.constant 0 : index
    %180 = vector.load %arg8[%c64_47, %c0_48] : memref<128x32xbf16, #tpu.memory_space<vmem>>, vector<16x32xbf16>
    tpu.vector_store %arg8[%c64_47, %c0_48], %179 {strides = array<i32>} : memref<128x32xbf16, #tpu.memory_space<vmem>>, vector<16x32xbf16>,
    %181 = arith.truncf %178 : vector<16x32xf32> to vector<16x32xbf16>
    %cst_49 = arith.constant dense<0.000000e+00> : vector<16x128xf32>
    %182 = tpu.matmul %181, %6, %cst_49 {dimension_numbers = #tpu.dot_dimension_numbers<[1], [0], [0], [1], [0, 0, 1, 1], [], []>} : vector<16x32xbf16>, vector<32x128xbf16>, vector<16x128xf32> -> vector<16x128xf32>
    %c80 = arith.constant 80 : index
    %c0_50 = arith.constant 0 : index
    %183 = vector.load %arg9[%c80, %c0_50] : memref<128x128xbf16, #tpu.memory_space<vmem>>, vector<16x128xbf16>
    %184 = arith.extf %183 : vector<16x128xbf16> to vector<16x128xf32>
    %185 = arith.addf %182, %184 : vector<16x128xf32>
    %186 = vector.broadcast %8 : vector<1x128xf32> to vector<16x128xf32>
    %187 = arith.addf %185, %186 : vector<16x128xf32>
    %188 = vector.extract_strided_slice %187 {offsets = [0, 0], sizes = [16, 32], strides = [1, 1]} : vector<16x128xf32> to vector<16x32xf32>
    %189 = arith.negf %188 : vector<16x32xf32>
    %190 = math.exp %189 : vector<16x32xf32>
    %cst_51 = arith.constant 1.000000e+00 : f32
    %191 = vector.broadcast %cst_51 : f32 to vector<16x32xf32>
    %192 = arith.addf %191, %190 : vector<16x32xf32>
    %193 = arith.divf %191, %192 : vector<16x32xf32>
    %194 = vector.extract_strided_slice %187 {offsets = [0, 32], sizes = [16, 32], strides = [1, 1]} : vector<16x128xf32> to vector<16x32xf32>
    %195 = arith.negf %194 : vector<16x32xf32>
    %196 = math.exp %195 : vector<16x32xf32>
    %cst_52 = arith.constant 1.000000e+00 : f32
    %197 = vector.broadcast %cst_52 : f32 to vector<16x32xf32>
    %198 = arith.addf %197, %196 : vector<16x32xf32>
    %199 = arith.divf %197, %198 : vector<16x32xf32>
    %200 = vector.extract_strided_slice %187 {offsets = [0, 64], sizes = [16, 32], strides = [1, 1]} : vector<16x128xf32> to vector<16x32xf32>
    %201 = math.tanh %200 : vector<16x32xf32>
    %202 = vector.extract_strided_slice %187 {offsets = [0, 96], sizes = [16, 32], strides = [1, 1]} : vector<16x128xf32> to vector<16x32xf32>
    %203 = arith.negf %202 : vector<16x32xf32>
    %204 = math.exp %203 : vector<16x32xf32>
    %cst_53 = arith.constant 1.000000e+00 : f32
    %205 = vector.broadcast %cst_53 : f32 to vector<16x32xf32>
    %206 = arith.addf %205, %204 : vector<16x32xf32>
    %207 = arith.divf %205, %206 : vector<16x32xf32>
    %208 = arith.mulf %199, %176 : vector<16x32xf32>
    %209 = arith.mulf %193, %201 : vector<16x32xf32>
    %210 = arith.addf %208, %209 : vector<16x32xf32>
    %211 = math.tanh %210 : vector<16x32xf32>
    %212 = arith.mulf %207, %211 : vector<16x32xf32>
    %213 = arith.truncf %212 : vector<16x32xf32> to vector<16x32xbf16>
    %c80_54 = arith.constant 80 : index
    %c0_55 = arith.constant 0 : index
    %214 = vector.load %arg8[%c80_54, %c0_55] : memref<128x32xbf16, #tpu.memory_space<vmem>>, vector<16x32xbf16>
    tpu.vector_store %arg8[%c80_54, %c0_55], %213 {strides = array<i32>} : memref<128x32xbf16, #tpu.memory_space<vmem>>, vector<16x32xbf16>,
    %215 = arith.truncf %212 : vector<16x32xf32> to vector<16x32xbf16>
    %cst_56 = arith.constant dense<0.000000e+00> : vector<16x128xf32>
    %216 = tpu.matmul %215, %6, %cst_56 {dimension_numbers = #tpu.dot_dimension_numbers<[1], [0], [0], [1], [0, 0, 1, 1], [], []>} : vector<16x32xbf16>, vector<32x128xbf16>, vector<16x128xf32> -> vector<16x128xf32>
    %c96 = arith.constant 96 : index
    %c0_57 = arith.constant 0 : index
    %217 = vector.load %arg9[%c96, %c0_57] : memref<128x128xbf16, #tpu.memory_space<vmem>>, vector<16x128xbf16>
    %218 = arith.extf %217 : vector<16x128xbf16> to vector<16x128xf32>
    %219 = arith.addf %216, %218 : vector<16x128xf32>
    %220 = vector.broadcast %8 : vector<1x128xf32> to vector<16x128xf32>
    %221 = arith.addf %219, %220 : vector<16x128xf32>
    %222 = vector.extract_strided_slice %221 {offsets = [0, 0], sizes = [16, 32], strides = [1, 1]} : vector<16x128xf32> to vector<16x32xf32>
    %223 = arith.negf %222 : vector<16x32xf32>
    %224 = math.exp %223 : vector<16x32xf32>
    %cst_58 = arith.constant 1.000000e+00 : f32
    %225 = vector.broadcast %cst_58 : f32 to vector<16x32xf32>
    %226 = arith.addf %225, %224 : vector<16x32xf32>
    %227 = arith.divf %225, %226 : vector<16x32xf32>
    %228 = vector.extract_strided_slice %221 {offsets = [0, 32], sizes = [16, 32], strides = [1, 1]} : vector<16x128xf32> to vector<16x32xf32>
    %229 = arith.negf %228 : vector<16x32xf32>
    %230 = math.exp %229 : vector<16x32xf32>
    %cst_59 = arith.constant 1.000000e+00 : f32
    %231 = vector.broadcast %cst_59 : f32 to vector<16x32xf32>
    %232 = arith.addf %231, %230 : vector<16x32xf32>
    %233 = arith.divf %231, %232 : vector<16x32xf32>
    %234 = vector.extract_strided_slice %221 {offsets = [0, 64], sizes = [16, 32], strides = [1, 1]} : vector<16x128xf32> to vector<16x32xf32>
    %235 = math.tanh %234 : vector<16x32xf32>
    %236 = vector.extract_strided_slice %221 {offsets = [0, 96], sizes = [16, 32], strides = [1, 1]} : vector<16x128xf32> to vector<16x32xf32>
    %237 = arith.negf %236 : vector<16x32xf32>
    %238 = math.exp %237 : vector<16x32xf32>
    %cst_60 = arith.constant 1.000000e+00 : f32
    %239 = vector.broadcast %cst_60 : f32 to vector<16x32xf32>
    %240 = arith.addf %239, %238 : vector<16x32xf32>
    %241 = arith.divf %239, %240 : vector<16x32xf32>
    %242 = arith.mulf %233, %210 : vector<16x32xf32>
    %243 = arith.mulf %227, %235 : vector<16x32xf32>
    %244 = arith.addf %242, %243 : vector<16x32xf32>
    %245 = math.tanh %244 : vector<16x32xf32>
    %246 = arith.mulf %241, %245 : vector<16x32xf32>
    %247 = arith.truncf %246 : vector<16x32xf32> to vector<16x32xbf16>
    %c96_61 = arith.constant 96 : index
    %c0_62 = arith.constant 0 : index
    %248 = vector.load %arg8[%c96_61, %c0_62] : memref<128x32xbf16, #tpu.memory_space<vmem>>, vector<16x32xbf16>
    tpu.vector_store %arg8[%c96_61, %c0_62], %247 {strides = array<i32>} : memref<128x32xbf16, #tpu.memory_space<vmem>>, vector<16x32xbf16>,
    %249 = arith.truncf %246 : vector<16x32xf32> to vector<16x32xbf16>
    %cst_63 = arith.constant dense<0.000000e+00> : vector<16x128xf32>
    %250 = tpu.matmul %249, %6, %cst_63 {dimension_numbers = #tpu.dot_dimension_numbers<[1], [0], [0], [1], [0, 0, 1, 1], [], []>} : vector<16x32xbf16>, vector<32x128xbf16>, vector<16x128xf32> -> vector<16x128xf32>
    %c112 = arith.constant 112 : index
    %c0_64 = arith.constant 0 : index
    %251 = vector.load %arg9[%c112, %c0_64] : memref<128x128xbf16, #tpu.memory_space<vmem>>, vector<16x128xbf16>
    %252 = arith.extf %251 : vector<16x128xbf16> to vector<16x128xf32>
    %253 = arith.addf %250, %252 : vector<16x128xf32>
    %254 = vector.broadcast %8 : vector<1x128xf32> to vector<16x128xf32>
    %255 = arith.addf %253, %254 : vector<16x128xf32>
    %256 = vector.extract_strided_slice %255 {offsets = [0, 0], sizes = [16, 32], strides = [1, 1]} : vector<16x128xf32> to vector<16x32xf32>
    %257 = arith.negf %256 : vector<16x32xf32>
    %258 = math.exp %257 : vector<16x32xf32>
    %cst_65 = arith.constant 1.000000e+00 : f32
    %259 = vector.broadcast %cst_65 : f32 to vector<16x32xf32>
    %260 = arith.addf %259, %258 : vector<16x32xf32>
    %261 = arith.divf %259, %260 : vector<16x32xf32>
    %262 = vector.extract_strided_slice %255 {offsets = [0, 32], sizes = [16, 32], strides = [1, 1]} : vector<16x128xf32> to vector<16x32xf32>
    %263 = arith.negf %262 : vector<16x32xf32>
    %264 = math.exp %263 : vector<16x32xf32>
    %cst_66 = arith.constant 1.000000e+00 : f32
    %265 = vector.broadcast %cst_66 : f32 to vector<16x32xf32>
    %266 = arith.addf %265, %264 : vector<16x32xf32>
    %267 = arith.divf %265, %266 : vector<16x32xf32>
    %268 = vector.extract_strided_slice %255 {offsets = [0, 64], sizes = [16, 32], strides = [1, 1]} : vector<16x128xf32> to vector<16x32xf32>
    %269 = math.tanh %268 : vector<16x32xf32>
    %270 = vector.extract_strided_slice %255 {offsets = [0, 96], sizes = [16, 32], strides = [1, 1]} : vector<16x128xf32> to vector<16x32xf32>
    %271 = arith.negf %270 : vector<16x32xf32>
    %272 = math.exp %271 : vector<16x32xf32>
    %cst_67 = arith.constant 1.000000e+00 : f32
    %273 = vector.broadcast %cst_67 : f32 to vector<16x32xf32>
    %274 = arith.addf %273, %272 : vector<16x32xf32>
    %275 = arith.divf %273, %274 : vector<16x32xf32>
    %276 = arith.mulf %267, %244 : vector<16x32xf32>
    %277 = arith.mulf %261, %269 : vector<16x32xf32>
    %278 = arith.addf %276, %277 : vector<16x32xf32>
    %279 = math.tanh %278 : vector<16x32xf32>
    %280 = arith.mulf %275, %279 : vector<16x32xf32>
    %281 = arith.truncf %280 : vector<16x32xf32> to vector<16x32xbf16>
    %c112_68 = arith.constant 112 : index
    %c0_69 = arith.constant 0 : index
    %282 = vector.load %arg8[%c112_68, %c0_69] : memref<128x32xbf16, #tpu.memory_space<vmem>>, vector<16x32xbf16>
    tpu.vector_store %arg8[%c112_68, %c0_69], %281 {strides = array<i32>} : memref<128x32xbf16, #tpu.memory_space<vmem>>, vector<16x32xbf16>,
    %c0_70 = arith.constant 0 : index
    %c0_71 = arith.constant 0 : index
    %c0_72 = arith.constant 0 : index
    %283 = vector.load %arg6[%c0_70, %c0_71, %c0_72] : memref<2x16x32xf32, #tpu.memory_space<vmem>>, vector<1x16x32xf32>
    %284 = vector.shape_cast %283 : vector<1x16x32xf32> to vector<16x32xf32>
    %285 = vector.shape_cast %280 : vector<16x32xf32> to vector<1x16x32xf32>
    tpu.vector_store %arg6[%c0_70, %c0_71, %c0_72], %285 {strides = array<i32>} : memref<2x16x32xf32, #tpu.memory_space<vmem>>, vector<1x16x32xf32>,
    %c0_73 = arith.constant 0 : index
    %c0_74 = arith.constant 0 : index
    %c0_75 = arith.constant 0 : index
    %286 = vector.load %arg7[%c0_73, %c0_74, %c0_75] : memref<2x16x32xf32, #tpu.memory_space<vmem>>, vector<1x16x32xf32>
    %287 = vector.shape_cast %286 : vector<1x16x32xf32> to vector<16x32xf32>
    %288 = vector.shape_cast %278 : vector<16x32xf32> to vector<1x16x32xf32>
    tpu.vector_store %arg7[%c0_73, %c0_74, %c0_75], %288 {strides = array<i32>} : memref<2x16x32xf32, #tpu.memory_space<vmem>>, vector<1x16x32xf32>,
    %c0_76 = arith.constant 0 : index
    %c0_77 = arith.constant 0 : index
    %289 = vector.load %arg8[%c0_76, %c0_77] : memref<128x32xbf16, #tpu.memory_space<vmem>>, vector<128x32xbf16>
    %c0_78 = arith.constant 0 : index
    %c0_79 = arith.constant 0 : index
    %c0_80 = arith.constant 0 : index
    %290 = vector.load %arg2[%c0_78, %c0_79, %c0_80] : memref<1x32x128xbf16, #tpu.memory_space<vmem>>, vector<1x32x128xbf16>
    %291 = vector.shape_cast %290 : vector<1x32x128xbf16> to vector<32x128xbf16>
    %cst_81 = arith.constant dense<0.000000e+00> : vector<128x128xf32>
    %292 = tpu.matmul %289, %291, %cst_81 {dimension_numbers = #tpu.dot_dimension_numbers<[1], [0], [0], [1], [0, 0, 1, 1], [], []>} : vector<128x32xbf16>, vector<32x128xbf16>, vector<128x128xf32> -> vector<128x128xf32>
    %293 = arith.truncf %292 : vector<128x128xf32> to vector<128x128xbf16>
    %c0_82 = arith.constant 0 : index
    %c0_83 = arith.constant 0 : index
    %294 = vector.load %arg9[%c0_82, %c0_83] : memref<128x128xbf16, #tpu.memory_space<vmem>>, vector<128x128xbf16>
    tpu.vector_store %arg9[%c0_82, %c0_83], %293 {strides = array<i32>} : memref<128x128xbf16, #tpu.memory_space<vmem>>, vector<128x128xbf16>,
    %c1 = arith.constant 1 : index
    %c0_84 = arith.constant 0 : index
    %c0_85 = arith.constant 0 : index
    %295 = vector.load %arg3[%c1, %c0_84, %c0_85] : memref<2x32x128xbf16, #tpu.memory_space<vmem>>, vector<1x32x128xbf16>
    %296 = vector.shape_cast %295 : vector<1x32x128xbf16> to vector<32x128xbf16>
    %c1_86 = arith.constant 1 : index
    %c0_87 = arith.constant 0 : index
    %c0_88 = arith.constant 0 : index
    %297 = vector.load %arg4[%c1_86, %c0_87, %c0_88] : memref<2x1x128xf32, #tpu.memory_space<vmem>>, vector<1x1x128xf32>
    %298 = vector.shape_cast %297 : vector<1x1x128xf32> to vector<1x128xf32>
    %cst_89 = arith.constant 0.000000e+00 : f32
    %299 = vector.broadcast %cst_89 : f32 to vector<16x32xf32>
    %cst_90 = arith.constant 0.000000e+00 : f32
    %300 = vector.broadcast %cst_90 : f32 to vector<16x32xf32>
    %301 = arith.truncf %299 : vector<16x32xf32> to vector<16x32xbf16>
    %cst_91 = arith.constant dense<0.000000e+00> : vector<16x128xf32>
    %302 = tpu.matmul %301, %296, %cst_91 {dimension_numbers = #tpu.dot_dimension_numbers<[1], [0], [0], [1], [0, 0, 1, 1], [], []>} : vector<16x32xbf16>, vector<32x128xbf16>, vector<16x128xf32> -> vector<16x128xf32>
    %c0_92 = arith.constant 0 : index
    %c0_93 = arith.constant 0 : index
    %303 = vector.load %arg9[%c0_92, %c0_93] : memref<128x128xbf16, #tpu.memory_space<vmem>>, vector<16x128xbf16>
    %304 = arith.extf %303 : vector<16x128xbf16> to vector<16x128xf32>
    %305 = arith.addf %302, %304 : vector<16x128xf32>
    %306 = vector.broadcast %298 : vector<1x128xf32> to vector<16x128xf32>
    %307 = arith.addf %305, %306 : vector<16x128xf32>
    %308 = vector.extract_strided_slice %307 {offsets = [0, 0], sizes = [16, 32], strides = [1, 1]} : vector<16x128xf32> to vector<16x32xf32>
    %309 = arith.negf %308 : vector<16x32xf32>
    %310 = math.exp %309 : vector<16x32xf32>
    %cst_94 = arith.constant 1.000000e+00 : f32
    %311 = vector.broadcast %cst_94 : f32 to vector<16x32xf32>
    %312 = arith.addf %311, %310 : vector<16x32xf32>
    %313 = arith.divf %311, %312 : vector<16x32xf32>
    %314 = vector.extract_strided_slice %307 {offsets = [0, 32], sizes = [16, 32], strides = [1, 1]} : vector<16x128xf32> to vector<16x32xf32>
    %315 = arith.negf %314 : vector<16x32xf32>
    %316 = math.exp %315 : vector<16x32xf32>
    %cst_95 = arith.constant 1.000000e+00 : f32
    %317 = vector.broadcast %cst_95 : f32 to vector<16x32xf32>
    %318 = arith.addf %317, %316 : vector<16x32xf32>
    %319 = arith.divf %317, %318 : vector<16x32xf32>
    %320 = vector.extract_strided_slice %307 {offsets = [0, 64], sizes = [16, 32], strides = [1, 1]} : vector<16x128xf32> to vector<16x32xf32>
    %321 = math.tanh %320 : vector<16x32xf32>
    %322 = vector.extract_strided_slice %307 {offsets = [0, 96], sizes = [16, 32], strides = [1, 1]} : vector<16x128xf32> to vector<16x32xf32>
    %323 = arith.negf %322 : vector<16x32xf32>
    %324 = math.exp %323 : vector<16x32xf32>
    %cst_96 = arith.constant 1.000000e+00 : f32
    %325 = vector.broadcast %cst_96 : f32 to vector<16x32xf32>
    %326 = arith.addf %325, %324 : vector<16x32xf32>
    %327 = arith.divf %325, %326 : vector<16x32xf32>
    %328 = arith.mulf %319, %300 : vector<16x32xf32>
    %329 = arith.mulf %313, %321 : vector<16x32xf32>
    %330 = arith.addf %328, %329 : vector<16x32xf32>
    %331 = math.tanh %330 : vector<16x32xf32>
    %332 = arith.mulf %327, %331 : vector<16x32xf32>
    %c0_97 = arith.constant 0 : index
    %c0_98 = arith.constant 0 : index
    %333 = vector.load %arg5[%c0_97, %c0_98] : memref<128x32xf32, #tpu.memory_space<vmem>>, vector<16x32xf32>
    tpu.vector_store %arg5[%c0_97, %c0_98], %332 {strides = array<i32>} : memref<128x32xf32, #tpu.memory_space<vmem>>, vector<16x32xf32>,
    %334 = arith.truncf %332 : vector<16x32xf32> to vector<16x32xbf16>
    %cst_99 = arith.constant dense<0.000000e+00> : vector<16x128xf32>
    %335 = tpu.matmul %334, %296, %cst_99 {dimension_numbers = #tpu.dot_dimension_numbers<[1], [0], [0], [1], [0, 0, 1, 1], [], []>} : vector<16x32xbf16>, vector<32x128xbf16>, vector<16x128xf32> -> vector<16x128xf32>
    %c16_100 = arith.constant 16 : index
    %c0_101 = arith.constant 0 : index
    %336 = vector.load %arg9[%c16_100, %c0_101] : memref<128x128xbf16, #tpu.memory_space<vmem>>, vector<16x128xbf16>
    %337 = arith.extf %336 : vector<16x128xbf16> to vector<16x128xf32>
    %338 = arith.addf %335, %337 : vector<16x128xf32>
    %339 = vector.broadcast %298 : vector<1x128xf32> to vector<16x128xf32>
    %340 = arith.addf %338, %339 : vector<16x128xf32>
    %341 = vector.extract_strided_slice %340 {offsets = [0, 0], sizes = [16, 32], strides = [1, 1]} : vector<16x128xf32> to vector<16x32xf32>
    %342 = arith.negf %341 : vector<16x32xf32>
    %343 = math.exp %342 : vector<16x32xf32>
    %cst_102 = arith.constant 1.000000e+00 : f32
    %344 = vector.broadcast %cst_102 : f32 to vector<16x32xf32>
    %345 = arith.addf %344, %343 : vector<16x32xf32>
    %346 = arith.divf %344, %345 : vector<16x32xf32>
    %347 = vector.extract_strided_slice %340 {offsets = [0, 32], sizes = [16, 32], strides = [1, 1]} : vector<16x128xf32> to vector<16x32xf32>
    %348 = arith.negf %347 : vector<16x32xf32>
    %349 = math.exp %348 : vector<16x32xf32>
    %cst_103 = arith.constant 1.000000e+00 : f32
    %350 = vector.broadcast %cst_103 : f32 to vector<16x32xf32>
    %351 = arith.addf %350, %349 : vector<16x32xf32>
    %352 = arith.divf %350, %351 : vector<16x32xf32>
    %353 = vector.extract_strided_slice %340 {offsets = [0, 64], sizes = [16, 32], strides = [1, 1]} : vector<16x128xf32> to vector<16x32xf32>
    %354 = math.tanh %353 : vector<16x32xf32>
    %355 = vector.extract_strided_slice %340 {offsets = [0, 96], sizes = [16, 32], strides = [1, 1]} : vector<16x128xf32> to vector<16x32xf32>
    %356 = arith.negf %355 : vector<16x32xf32>
    %357 = math.exp %356 : vector<16x32xf32>
    %cst_104 = arith.constant 1.000000e+00 : f32
    %358 = vector.broadcast %cst_104 : f32 to vector<16x32xf32>
    %359 = arith.addf %358, %357 : vector<16x32xf32>
    %360 = arith.divf %358, %359 : vector<16x32xf32>
    %361 = arith.mulf %352, %330 : vector<16x32xf32>
    %362 = arith.mulf %346, %354 : vector<16x32xf32>
    %363 = arith.addf %361, %362 : vector<16x32xf32>
    %364 = math.tanh %363 : vector<16x32xf32>
    %365 = arith.mulf %360, %364 : vector<16x32xf32>
    %c16_105 = arith.constant 16 : index
    %c0_106 = arith.constant 0 : index
    %366 = vector.load %arg5[%c16_105, %c0_106] : memref<128x32xf32, #tpu.memory_space<vmem>>, vector<16x32xf32>
    tpu.vector_store %arg5[%c16_105, %c0_106], %365 {strides = array<i32>} : memref<128x32xf32, #tpu.memory_space<vmem>>, vector<16x32xf32>,
    %367 = arith.truncf %365 : vector<16x32xf32> to vector<16x32xbf16>
    %cst_107 = arith.constant dense<0.000000e+00> : vector<16x128xf32>
    %368 = tpu.matmul %367, %296, %cst_107 {dimension_numbers = #tpu.dot_dimension_numbers<[1], [0], [0], [1], [0, 0, 1, 1], [], []>} : vector<16x32xbf16>, vector<32x128xbf16>, vector<16x128xf32> -> vector<16x128xf32>
    %c32_108 = arith.constant 32 : index
    %c0_109 = arith.constant 0 : index
    %369 = vector.load %arg9[%c32_108, %c0_109] : memref<128x128xbf16, #tpu.memory_space<vmem>>, vector<16x128xbf16>
    %370 = arith.extf %369 : vector<16x128xbf16> to vector<16x128xf32>
    %371 = arith.addf %368, %370 : vector<16x128xf32>
    %372 = vector.broadcast %298 : vector<1x128xf32> to vector<16x128xf32>
    %373 = arith.addf %371, %372 : vector<16x128xf32>
    %374 = vector.extract_strided_slice %373 {offsets = [0, 0], sizes = [16, 32], strides = [1, 1]} : vector<16x128xf32> to vector<16x32xf32>
    %375 = arith.negf %374 : vector<16x32xf32>
    %376 = math.exp %375 : vector<16x32xf32>
    %cst_110 = arith.constant 1.000000e+00 : f32
    %377 = vector.broadcast %cst_110 : f32 to vector<16x32xf32>
    %378 = arith.addf %377, %376 : vector<16x32xf32>
    %379 = arith.divf %377, %378 : vector<16x32xf32>
    %380 = vector.extract_strided_slice %373 {offsets = [0, 32], sizes = [16, 32], strides = [1, 1]} : vector<16x128xf32> to vector<16x32xf32>
    %381 = arith.negf %380 : vector<16x32xf32>
    %382 = math.exp %381 : vector<16x32xf32>
    %cst_111 = arith.constant 1.000000e+00 : f32
    %383 = vector.broadcast %cst_111 : f32 to vector<16x32xf32>
    %384 = arith.addf %383, %382 : vector<16x32xf32>
    %385 = arith.divf %383, %384 : vector<16x32xf32>
    %386 = vector.extract_strided_slice %373 {offsets = [0, 64], sizes = [16, 32], strides = [1, 1]} : vector<16x128xf32> to vector<16x32xf32>
    %387 = math.tanh %386 : vector<16x32xf32>
    %388 = vector.extract_strided_slice %373 {offsets = [0, 96], sizes = [16, 32], strides = [1, 1]} : vector<16x128xf32> to vector<16x32xf32>
    %389 = arith.negf %388 : vector<16x32xf32>
    %390 = math.exp %389 : vector<16x32xf32>
    %cst_112 = arith.constant 1.000000e+00 : f32
    %391 = vector.broadcast %cst_112 : f32 to vector<16x32xf32>
    %392 = arith.addf %391, %390 : vector<16x32xf32>
    %393 = arith.divf %391, %392 : vector<16x32xf32>
    %394 = arith.mulf %385, %363 : vector<16x32xf32>
    %395 = arith.mulf %379, %387 : vector<16x32xf32>
    %396 = arith.addf %394, %395 : vector<16x32xf32>
    %397 = math.tanh %396 : vector<16x32xf32>
    %398 = arith.mulf %393, %397 : vector<16x32xf32>
    %c32_113 = arith.constant 32 : index
    %c0_114 = arith.constant 0 : index
    %399 = vector.load %arg5[%c32_113, %c0_114] : memref<128x32xf32, #tpu.memory_space<vmem>>, vector<16x32xf32>
    tpu.vector_store %arg5[%c32_113, %c0_114], %398 {strides = array<i32>} : memref<128x32xf32, #tpu.memory_space<vmem>>, vector<16x32xf32>,
    %400 = arith.truncf %398 : vector<16x32xf32> to vector<16x32xbf16>
    %cst_115 = arith.constant dense<0.000000e+00> : vector<16x128xf32>
    %401 = tpu.matmul %400, %296, %cst_115 {dimension_numbers = #tpu.dot_dimension_numbers<[1], [0], [0], [1], [0, 0, 1, 1], [], []>} : vector<16x32xbf16>, vector<32x128xbf16>, vector<16x128xf32> -> vector<16x128xf32>
    %c48_116 = arith.constant 48 : index
    %c0_117 = arith.constant 0 : index
    %402 = vector.load %arg9[%c48_116, %c0_117] : memref<128x128xbf16, #tpu.memory_space<vmem>>, vector<16x128xbf16>
    %403 = arith.extf %402 : vector<16x128xbf16> to vector<16x128xf32>
    %404 = arith.addf %401, %403 : vector<16x128xf32>
    %405 = vector.broadcast %298 : vector<1x128xf32> to vector<16x128xf32>
    %406 = arith.addf %404, %405 : vector<16x128xf32>
    %407 = vector.extract_strided_slice %406 {offsets = [0, 0], sizes = [16, 32], strides = [1, 1]} : vector<16x128xf32> to vector<16x32xf32>
    %408 = arith.negf %407 : vector<16x32xf32>
    %409 = math.exp %408 : vector<16x32xf32>
    %cst_118 = arith.constant 1.000000e+00 : f32
    %410 = vector.broadcast %cst_118 : f32 to vector<16x32xf32>
    %411 = arith.addf %410, %409 : vector<16x32xf32>
    %412 = arith.divf %410, %411 : vector<16x32xf32>
    %413 = vector.extract_strided_slice %406 {offsets = [0, 32], sizes = [16, 32], strides = [1, 1]} : vector<16x128xf32> to vector<16x32xf32>
    %414 = arith.negf %413 : vector<16x32xf32>
    %415 = math.exp %414 : vector<16x32xf32>
    %cst_119 = arith.constant 1.000000e+00 : f32
    %416 = vector.broadcast %cst_119 : f32 to vector<16x32xf32>
    %417 = arith.addf %416, %415 : vector<16x32xf32>
    %418 = arith.divf %416, %417 : vector<16x32xf32>
    %419 = vector.extract_strided_slice %406 {offsets = [0, 64], sizes = [16, 32], strides = [1, 1]} : vector<16x128xf32> to vector<16x32xf32>
    %420 = math.tanh %419 : vector<16x32xf32>
    %421 = vector.extract_strided_slice %406 {offsets = [0, 96], sizes = [16, 32], strides = [1, 1]} : vector<16x128xf32> to vector<16x32xf32>
    %422 = arith.negf %421 : vector<16x32xf32>
    %423 = math.exp %422 : vector<16x32xf32>
    %cst_120 = arith.constant 1.000000e+00 : f32
    %424 = vector.broadcast %cst_120 : f32 to vector<16x32xf32>
    %425 = arith.addf %424, %423 : vector<16x32xf32>
    %426 = arith.divf %424, %425 : vector<16x32xf32>
    %427 = arith.mulf %418, %396 : vector<16x32xf32>
    %428 = arith.mulf %412, %420 : vector<16x32xf32>
    %429 = arith.addf %427, %428 : vector<16x32xf32>
    %430 = math.tanh %429 : vector<16x32xf32>
    %431 = arith.mulf %426, %430 : vector<16x32xf32>
    %c48_121 = arith.constant 48 : index
    %c0_122 = arith.constant 0 : index
    %432 = vector.load %arg5[%c48_121, %c0_122] : memref<128x32xf32, #tpu.memory_space<vmem>>, vector<16x32xf32>
    tpu.vector_store %arg5[%c48_121, %c0_122], %431 {strides = array<i32>} : memref<128x32xf32, #tpu.memory_space<vmem>>, vector<16x32xf32>,
    %433 = arith.truncf %431 : vector<16x32xf32> to vector<16x32xbf16>
    %cst_123 = arith.constant dense<0.000000e+00> : vector<16x128xf32>
    %434 = tpu.matmul %433, %296, %cst_123 {dimension_numbers = #tpu.dot_dimension_numbers<[1], [0], [0], [1], [0, 0, 1, 1], [], []>} : vector<16x32xbf16>, vector<32x128xbf16>, vector<16x128xf32> -> vector<16x128xf32>
    %c64_124 = arith.constant 64 : index
    %c0_125 = arith.constant 0 : index
    %435 = vector.load %arg9[%c64_124, %c0_125] : memref<128x128xbf16, #tpu.memory_space<vmem>>, vector<16x128xbf16>
    %436 = arith.extf %435 : vector<16x128xbf16> to vector<16x128xf32>
    %437 = arith.addf %434, %436 : vector<16x128xf32>
    %438 = vector.broadcast %298 : vector<1x128xf32> to vector<16x128xf32>
    %439 = arith.addf %437, %438 : vector<16x128xf32>
    %440 = vector.extract_strided_slice %439 {offsets = [0, 0], sizes = [16, 32], strides = [1, 1]} : vector<16x128xf32> to vector<16x32xf32>
    %441 = arith.negf %440 : vector<16x32xf32>
    %442 = math.exp %441 : vector<16x32xf32>
    %cst_126 = arith.constant 1.000000e+00 : f32
    %443 = vector.broadcast %cst_126 : f32 to vector<16x32xf32>
    %444 = arith.addf %443, %442 : vector<16x32xf32>
    %445 = arith.divf %443, %444 : vector<16x32xf32>
    %446 = vector.extract_strided_slice %439 {offsets = [0, 32], sizes = [16, 32], strides = [1, 1]} : vector<16x128xf32> to vector<16x32xf32>
    %447 = arith.negf %446 : vector<16x32xf32>
    %448 = math.exp %447 : vector<16x32xf32>
    %cst_127 = arith.constant 1.000000e+00 : f32
    %449 = vector.broadcast %cst_127 : f32 to vector<16x32xf32>
    %450 = arith.addf %449, %448 : vector<16x32xf32>
    %451 = arith.divf %449, %450 : vector<16x32xf32>
    %452 = vector.extract_strided_slice %439 {offsets = [0, 64], sizes = [16, 32], strides = [1, 1]} : vector<16x128xf32> to vector<16x32xf32>
    %453 = math.tanh %452 : vector<16x32xf32>
    %454 = vector.extract_strided_slice %439 {offsets = [0, 96], sizes = [16, 32], strides = [1, 1]} : vector<16x128xf32> to vector<16x32xf32>
    %455 = arith.negf %454 : vector<16x32xf32>
    %456 = math.exp %455 : vector<16x32xf32>
    %cst_128 = arith.constant 1.000000e+00 : f32
    %457 = vector.broadcast %cst_128 : f32 to vector<16x32xf32>
    %458 = arith.addf %457, %456 : vector<16x32xf32>
    %459 = arith.divf %457, %458 : vector<16x32xf32>
    %460 = arith.mulf %451, %429 : vector<16x32xf32>
    %461 = arith.mulf %445, %453 : vector<16x32xf32>
    %462 = arith.addf %460, %461 : vector<16x32xf32>
    %463 = math.tanh %462 : vector<16x32xf32>
    %464 = arith.mulf %459, %463 : vector<16x32xf32>
    %c64_129 = arith.constant 64 : index
    %c0_130 = arith.constant 0 : index
    %465 = vector.load %arg5[%c64_129, %c0_130] : memref<128x32xf32, #tpu.memory_space<vmem>>, vector<16x32xf32>
    tpu.vector_store %arg5[%c64_129, %c0_130], %464 {strides = array<i32>} : memref<128x32xf32, #tpu.memory_space<vmem>>, vector<16x32xf32>,
    %466 = arith.truncf %464 : vector<16x32xf32> to vector<16x32xbf16>
    %cst_131 = arith.constant dense<0.000000e+00> : vector<16x128xf32>
    %467 = tpu.matmul %466, %296, %cst_131 {dimension_numbers = #tpu.dot_dimension_numbers<[1], [0], [0], [1], [0, 0, 1, 1], [], []>} : vector<16x32xbf16>, vector<32x128xbf16>, vector<16x128xf32> -> vector<16x128xf32>
    %c80_132 = arith.constant 80 : index
    %c0_133 = arith.constant 0 : index
    %468 = vector.load %arg9[%c80_132, %c0_133] : memref<128x128xbf16, #tpu.memory_space<vmem>>, vector<16x128xbf16>
    %469 = arith.extf %468 : vector<16x128xbf16> to vector<16x128xf32>
    %470 = arith.addf %467, %469 : vector<16x128xf32>
    %471 = vector.broadcast %298 : vector<1x128xf32> to vector<16x128xf32>
    %472 = arith.addf %470, %471 : vector<16x128xf32>
    %473 = vector.extract_strided_slice %472 {offsets = [0, 0], sizes = [16, 32], strides = [1, 1]} : vector<16x128xf32> to vector<16x32xf32>
    %474 = arith.negf %473 : vector<16x32xf32>
    %475 = math.exp %474 : vector<16x32xf32>
    %cst_134 = arith.constant 1.000000e+00 : f32
    %476 = vector.broadcast %cst_134 : f32 to vector<16x32xf32>
    %477 = arith.addf %476, %475 : vector<16x32xf32>
    %478 = arith.divf %476, %477 : vector<16x32xf32>
    %479 = vector.extract_strided_slice %472 {offsets = [0, 32], sizes = [16, 32], strides = [1, 1]} : vector<16x128xf32> to vector<16x32xf32>
    %480 = arith.negf %479 : vector<16x32xf32>
    %481 = math.exp %480 : vector<16x32xf32>
    %cst_135 = arith.constant 1.000000e+00 : f32
    %482 = vector.broadcast %cst_135 : f32 to vector<16x32xf32>
    %483 = arith.addf %482, %481 : vector<16x32xf32>
    %484 = arith.divf %482, %483 : vector<16x32xf32>
    %485 = vector.extract_strided_slice %472 {offsets = [0, 64], sizes = [16, 32], strides = [1, 1]} : vector<16x128xf32> to vector<16x32xf32>
    %486 = math.tanh %485 : vector<16x32xf32>
    %487 = vector.extract_strided_slice %472 {offsets = [0, 96], sizes = [16, 32], strides = [1, 1]} : vector<16x128xf32> to vector<16x32xf32>
    %488 = arith.negf %487 : vector<16x32xf32>
    %489 = math.exp %488 : vector<16x32xf32>
    %cst_136 = arith.constant 1.000000e+00 : f32
    %490 = vector.broadcast %cst_136 : f32 to vector<16x32xf32>
    %491 = arith.addf %490, %489 : vector<16x32xf32>
    %492 = arith.divf %490, %491 : vector<16x32xf32>
    %493 = arith.mulf %484, %462 : vector<16x32xf32>
    %494 = arith.mulf %478, %486 : vector<16x32xf32>
    %495 = arith.addf %493, %494 : vector<16x32xf32>
    %496 = math.tanh %495 : vector<16x32xf32>
    %497 = arith.mulf %492, %496 : vector<16x32xf32>
    %c80_137 = arith.constant 80 : index
    %c0_138 = arith.constant 0 : index
    %498 = vector.load %arg5[%c80_137, %c0_138] : memref<128x32xf32, #tpu.memory_space<vmem>>, vector<16x32xf32>
    tpu.vector_store %arg5[%c80_137, %c0_138], %497 {strides = array<i32>} : memref<128x32xf32, #tpu.memory_space<vmem>>, vector<16x32xf32>,
    %499 = arith.truncf %497 : vector<16x32xf32> to vector<16x32xbf16>
    %cst_139 = arith.constant dense<0.000000e+00> : vector<16x128xf32>
    %500 = tpu.matmul %499, %296, %cst_139 {dimension_numbers = #tpu.dot_dimension_numbers<[1], [0], [0], [1], [0, 0, 1, 1], [], []>} : vector<16x32xbf16>, vector<32x128xbf16>, vector<16x128xf32> -> vector<16x128xf32>
    %c96_140 = arith.constant 96 : index
    %c0_141 = arith.constant 0 : index
    %501 = vector.load %arg9[%c96_140, %c0_141] : memref<128x128xbf16, #tpu.memory_space<vmem>>, vector<16x128xbf16>
    %502 = arith.extf %501 : vector<16x128xbf16> to vector<16x128xf32>
    %503 = arith.addf %500, %502 : vector<16x128xf32>
    %504 = vector.broadcast %298 : vector<1x128xf32> to vector<16x128xf32>
    %505 = arith.addf %503, %504 : vector<16x128xf32>
    %506 = vector.extract_strided_slice %505 {offsets = [0, 0], sizes = [16, 32], strides = [1, 1]} : vector<16x128xf32> to vector<16x32xf32>
    %507 = arith.negf %506 : vector<16x32xf32>
    %508 = math.exp %507 : vector<16x32xf32>
    %cst_142 = arith.constant 1.000000e+00 : f32
    %509 = vector.broadcast %cst_142 : f32 to vector<16x32xf32>
    %510 = arith.addf %509, %508 : vector<16x32xf32>
    %511 = arith.divf %509, %510 : vector<16x32xf32>
    %512 = vector.extract_strided_slice %505 {offsets = [0, 32], sizes = [16, 32], strides = [1, 1]} : vector<16x128xf32> to vector<16x32xf32>
    %513 = arith.negf %512 : vector<16x32xf32>
    %514 = math.exp %513 : vector<16x32xf32>
    %cst_143 = arith.constant 1.000000e+00 : f32
    %515 = vector.broadcast %cst_143 : f32 to vector<16x32xf32>
    %516 = arith.addf %515, %514 : vector<16x32xf32>
    %517 = arith.divf %515, %516 : vector<16x32xf32>
    %518 = vector.extract_strided_slice %505 {offsets = [0, 64], sizes = [16, 32], strides = [1, 1]} : vector<16x128xf32> to vector<16x32xf32>
    %519 = math.tanh %518 : vector<16x32xf32>
    %520 = vector.extract_strided_slice %505 {offsets = [0, 96], sizes = [16, 32], strides = [1, 1]} : vector<16x128xf32> to vector<16x32xf32>
    %521 = arith.negf %520 : vector<16x32xf32>
    %522 = math.exp %521 : vector<16x32xf32>
    %cst_144 = arith.constant 1.000000e+00 : f32
    %523 = vector.broadcast %cst_144 : f32 to vector<16x32xf32>
    %524 = arith.addf %523, %522 : vector<16x32xf32>
    %525 = arith.divf %523, %524 : vector<16x32xf32>
    %526 = arith.mulf %517, %495 : vector<16x32xf32>
    %527 = arith.mulf %511, %519 : vector<16x32xf32>
    %528 = arith.addf %526, %527 : vector<16x32xf32>
    %529 = math.tanh %528 : vector<16x32xf32>
    %530 = arith.mulf %525, %529 : vector<16x32xf32>
    %c96_145 = arith.constant 96 : index
    %c0_146 = arith.constant 0 : index
    %531 = vector.load %arg5[%c96_145, %c0_146] : memref<128x32xf32, #tpu.memory_space<vmem>>, vector<16x32xf32>
    tpu.vector_store %arg5[%c96_145, %c0_146], %530 {strides = array<i32>} : memref<128x32xf32, #tpu.memory_space<vmem>>, vector<16x32xf32>,
    %532 = arith.truncf %530 : vector<16x32xf32> to vector<16x32xbf16>
    %cst_147 = arith.constant dense<0.000000e+00> : vector<16x128xf32>
    %533 = tpu.matmul %532, %296, %cst_147 {dimension_numbers = #tpu.dot_dimension_numbers<[1], [0], [0], [1], [0, 0, 1, 1], [], []>} : vector<16x32xbf16>, vector<32x128xbf16>, vector<16x128xf32> -> vector<16x128xf32>
    %c112_148 = arith.constant 112 : index
    %c0_149 = arith.constant 0 : index
    %534 = vector.load %arg9[%c112_148, %c0_149] : memref<128x128xbf16, #tpu.memory_space<vmem>>, vector<16x128xbf16>
    %535 = arith.extf %534 : vector<16x128xbf16> to vector<16x128xf32>
    %536 = arith.addf %533, %535 : vector<16x128xf32>
    %537 = vector.broadcast %298 : vector<1x128xf32> to vector<16x128xf32>
    %538 = arith.addf %536, %537 : vector<16x128xf32>
    %539 = vector.extract_strided_slice %538 {offsets = [0, 0], sizes = [16, 32], strides = [1, 1]} : vector<16x128xf32> to vector<16x32xf32>
    %540 = arith.negf %539 : vector<16x32xf32>
    %541 = math.exp %540 : vector<16x32xf32>
    %cst_150 = arith.constant 1.000000e+00 : f32
    %542 = vector.broadcast %cst_150 : f32 to vector<16x32xf32>
    %543 = arith.addf %542, %541 : vector<16x32xf32>
    %544 = arith.divf %542, %543 : vector<16x32xf32>
    %545 = vector.extract_strided_slice %538 {offsets = [0, 32], sizes = [16, 32], strides = [1, 1]} : vector<16x128xf32> to vector<16x32xf32>
    %546 = arith.negf %545 : vector<16x32xf32>
    %547 = math.exp %546 : vector<16x32xf32>
    %cst_151 = arith.constant 1.000000e+00 : f32
    %548 = vector.broadcast %cst_151 : f32 to vector<16x32xf32>
    %549 = arith.addf %548, %547 : vector<16x32xf32>
    %550 = arith.divf %548, %549 : vector<16x32xf32>
    %551 = vector.extract_strided_slice %538 {offsets = [0, 64], sizes = [16, 32], strides = [1, 1]} : vector<16x128xf32> to vector<16x32xf32>
    %552 = math.tanh %551 : vector<16x32xf32>
    %553 = vector.extract_strided_slice %538 {offsets = [0, 96], sizes = [16, 32], strides = [1, 1]} : vector<16x128xf32> to vector<16x32xf32>
    %554 = arith.negf %553 : vector<16x32xf32>
    %555 = math.exp %554 : vector<16x32xf32>
    %cst_152 = arith.constant 1.000000e+00 : f32
    %556 = vector.broadcast %cst_152 : f32 to vector<16x32xf32>
    %557 = arith.addf %556, %555 : vector<16x32xf32>
    %558 = arith.divf %556, %557 : vector<16x32xf32>
    %559 = arith.mulf %550, %528 : vector<16x32xf32>
    %560 = arith.mulf %544, %552 : vector<16x32xf32>
    %561 = arith.addf %559, %560 : vector<16x32xf32>
    %562 = math.tanh %561 : vector<16x32xf32>
    %563 = arith.mulf %558, %562 : vector<16x32xf32>
    %c112_153 = arith.constant 112 : index
    %c0_154 = arith.constant 0 : index
    %564 = vector.load %arg5[%c112_153, %c0_154] : memref<128x32xf32, #tpu.memory_space<vmem>>, vector<16x32xf32>
    tpu.vector_store %arg5[%c112_153, %c0_154], %563 {strides = array<i32>} : memref<128x32xf32, #tpu.memory_space<vmem>>, vector<16x32xf32>,
    %c1_155 = arith.constant 1 : index
    %c0_156 = arith.constant 0 : index
    %c0_157 = arith.constant 0 : index
    %565 = vector.load %arg6[%c1_155, %c0_156, %c0_157] : memref<2x16x32xf32, #tpu.memory_space<vmem>>, vector<1x16x32xf32>
    %566 = vector.shape_cast %565 : vector<1x16x32xf32> to vector<16x32xf32>
    %567 = vector.shape_cast %563 : vector<16x32xf32> to vector<1x16x32xf32>
    tpu.vector_store %arg6[%c1_155, %c0_156, %c0_157], %567 {strides = array<i32>} : memref<2x16x32xf32, #tpu.memory_space<vmem>>, vector<1x16x32xf32>,
    %c1_158 = arith.constant 1 : index
    %c0_159 = arith.constant 0 : index
    %c0_160 = arith.constant 0 : index
    %568 = vector.load %arg7[%c1_158, %c0_159, %c0_160] : memref<2x16x32xf32, #tpu.memory_space<vmem>>, vector<1x16x32xf32>
    %569 = vector.shape_cast %568 : vector<1x16x32xf32> to vector<16x32xf32>
    %570 = vector.shape_cast %561 : vector<16x32xf32> to vector<1x16x32xf32>
    tpu.vector_store %arg7[%c1_158, %c0_159, %c0_160], %570 {strides = array<i32>} : memref<2x16x32xf32, #tpu.memory_space<vmem>>, vector<1x16x32xf32>,
    return
  }
}

</mosaic_0001>

<llo_original>
// kernel: encoder_forward.1
$region0: #{encoder_forward.1}
  #allocation0 [shape = 'u32[]', space=smem, size = 0x4, offset = 0x4, fixed_abs, tag = 'smem constant byte address 0x4 - core index']
  #allocation1 [shape = 'u32[144,128]{1,0:T(1,128)}', space=vmem, size = 0x12000, scoped, tag = 'internal scratch']
  #allocation2 [shape = 'bf16[128,32]{1,0:T(16,128)(2,1)}', space=vmem, size = 0x8000, scoped, tag = 'scratch operand']
  #allocation3 [shape = 'bf16[128,128]{1,0:T(16,128)(2,1)}', space=vmem, size = 0x8000, scoped, tag = 'scratch operand']
  %s0 = inlined_call_operand.vmem [shape: bf16[128,32], index: 0, kind: input, shape index: {}]
  %s1 = inlined_call_operand.vmem [shape: bf16[32,128], index: 1, kind: input, shape index: {}]
  %s2 = inlined_call_operand.vmem [shape: bf16[1,32,128], index: 2, kind: input, shape index: {}]
  %s3 = inlined_call_operand.vmem [shape: bf16[2,32,128], index: 3, kind: input, shape index: {}]
  %s4 = inlined_call_operand.vmem [shape: f32[2,1,128], index: 4, kind: input, shape index: {}]
  %s5 = inlined_call_operand.vmem [shape: f32[128,32], index: 5, kind: output, shape index: {0}]
  %s6 = inlined_call_operand.vmem [shape: f32[2,16,32], index: 6, kind: output, shape index: {1}]
  %s7 = inlined_call_operand.vmem [shape: f32[2,16,32], index: 7, kind: output, shape index: {2}]
  %8 = xla_tuple %s5, %s6, %s7
  %s9 = sld [smem:[#allocation0]]
  $region46: #{encoder_forward.1} parent=0
    _
  %s11 = ssub.s32 1, %s9
  %s12 = scalar_select 0, %s11, %s9
  // Predicated region
  $region2: #{encoder_forward.1} parent=0 // pred_check
    _
  $region3: #{encoder_forward.1} parent=0 // pred_check_branch
    %14 = sbr.rel (0) target = $region5
  $region4: #{encoder_forward.1} parent=0 // pred_region
    _
  $region5: #{encoder_forward.1} parent=0 // pred_fallthru
    _
  // Predicated region
  $region6: #{encoder_forward.1} parent=0 // pred_check
    _
  $region7: #{encoder_forward.1} parent=0 // pred_check_branch
    %16 = sbr.rel (0) target = $region9
  $region8: #{encoder_forward.1} parent=0 // pred_region
    _
  $region9: #{encoder_forward.1} parent=0 // pred_fallthru
    _
  // Predicated region
  $region10: #{encoder_forward.1} parent=0 // pred_check
    _
  $region11: #{encoder_forward.1} parent=0 // pred_check_branch
    %18 = sbr.rel (0) target = $region13
  $region12: #{encoder_forward.1} parent=0 // pred_region
    _
  $region13: #{encoder_forward.1} parent=0 // pred_fallthru
    _
  // Predicated region
  $region14: #{encoder_forward.1} parent=0 // pred_check
    _
  $region15: #{encoder_forward.1} parent=0 // pred_check_branch
    %20 = sbr.rel (0) target = $region17
  $region16: #{encoder_forward.1} parent=0 // pred_region
    _
  $region17: #{encoder_forward.1} parent=0 // pred_fallthru
    _
  // Predicated region
  $region18: #{encoder_forward.1} parent=0 // pred_check
    _
  $region19: #{encoder_forward.1} parent=0 // pred_check_branch
    %22 = sbr.rel (0) target = $region21
  $region20: #{encoder_forward.1} parent=0 // pred_region
    _
  $region21: #{encoder_forward.1} parent=0 // pred_fallthru
    _
  %v24 = vld [vmem:[%s0] sm:$0xf]
  %v25 = vld [vmem:[%s0 + $0x4] sm:$0xf]
  %v26 = vld [vmem:[%s0 + $0x8] sm:$0xf]
  %v27 = vld [vmem:[%s0 + $0xc] sm:$0xf]
  %v28 = vld [vmem:[%s0 + $0x10] sm:$0xf]
  %v29 = vld [vmem:[%s0 + $0x14] sm:$0xf]
  %v30 = vld [vmem:[%s0 + $0x18] sm:$0xf]
  %v31 = vld [vmem:[%s0 + $0x1c] sm:$0xf]
  %v32 = vld [vmem:[%s0 + $0x20] sm:$0xf]
  %v33 = vld [vmem:[%s0 + $0x24] sm:$0xf]
  %v34 = vld [vmem:[%s0 + $0x28] sm:$0xf]
  %v35 = vld [vmem:[%s0 + $0x2c] sm:$0xf]
  %v36 = vld [vmem:[%s0 + $0x30] sm:$0xf]
  %v37 = vld [vmem:[%s0 + $0x34] sm:$0xf]
  %v38 = vld [vmem:[%s0 + $0x38] sm:$0xf]
  %v39 = vld [vmem:[%s0 + $0x3c] sm:$0xf]
  %v40 = vld [vmem:[%s1] sm:$0xf]
  %v41 = vld [vmem:[%s1 + $0x4] sm:$0xf]
  %v42 = vld [vmem:[%s1 + $0x8] sm:$0xf]
  %v43 = vld [vmem:[%s1 + $0xc] sm:$0xf]
  %v60 = vunpack.c.l.b16 %v24
  %v61 = vunpack.c.l.b16 %v25
  %v62 = vunpack.c.l.b16 %v26
  %v63 = vunpack.c.l.b16 %v27
  %v64 = vunpack.c.l.b16 %v28
  %v65 = vunpack.c.l.b16 %v29
  %v66 = vunpack.c.l.b16 %v30
  %v67 = vunpack.c.l.b16 %v31
  %v68 = vunpack.c.l.b16 %v32
  %v69 = vunpack.c.l.b16 %v33
  %v70 = vunpack.c.l.b16 %v34
  %v71 = vunpack.c.l.b16 %v35
  %v72 = vunpack.c.l.b16 %v36
  %v73 = vunpack.c.l.b16 %v37
  %v74 = vunpack.c.l.b16 %v38
  %v75 = vunpack.c.l.b16 %v39
  %v76 = vpack.c.b16 %v61, %v60
  %v77 = vpack.c.b16 %v63, %v62
  %v78 = vpack.c.b16 %v65, %v64
  %v79 = vpack.c.b16 %v67, %v66
  %v80 = vpack.c.b16 %v69, %v68
  %v81 = vpack.c.b16 %v71, %v70
  %v82 = vpack.c.b16 %v73, %v72
  %v83 = vpack.c.b16 %v75, %v74
  %v88 = vunpack.c.l.b16 %v40
  %v89 = vunpack.c.l.b16 %v41
  %v90 = vunpack.c.l.b16 %v42
  %v91 = vunpack.c.l.b16 %v43
  %v92 = vpack.c.b16 %v89, %v88
  %v93 = vpack.c.b16 %v91, %v90
  %vm96 = vcmask 261120
  %v98 = vsel %vm96, %v76, 0
  %v101 = vsel %vm96, %v77, 0
  %v104 = vsel %vm96, %v78, 0
  %v107 = vsel %vm96, %v79, 0
  %v110 = vsel %vm96, %v80, 0
  %v113 = vsel %vm96, %v81, 0
  %v116 = vsel %vm96, %v82, 0
  %v119 = vsel %vm96, %v83, 0
  %121 = vmatprep.subr.bf16.mxu0 0
  %122 = vmatpush1.bf16.msra.mxu0 %v92
  %123 = vmatprep.subr.bf16.mxu0 0
  %124 = vmatpush1.bf16.msra.mxu0 %v93
  %125 = vmatprep.subr.bf16.mxu0 0
  %126 = vmatpush1.bf16.msra.mxu0 0
  %127 = vmatprep.subr.bf16.mxu0 0
  %128 = vmatpush1.bf16.msra.mxu0 0
  %129 = vmatprep.subr.bf16.mxu0 0
  %130 = vmatpush1.bf16.msra.mxu0 0
  %131 = vmatprep.subr.bf16.mxu0 0
  %132 = vmatpush1.bf16.msra.mxu0 0
  %133 = vmatprep.subr.bf16.mxu0 0
  %134 = vmatpush1.bf16.msra.mxu0 0
  %135 = vmatprep.subr.bf16.mxu0 0
  %136 = vmatpush1.bf16.msra.mxu0 0
  %137 = vmatprep.subr.bf16.mxu0 0
  %138 = vmatpush1.bf16.msra.mxu0 0
  %139 = vmatprep.subr.bf16.mxu0 0
  %140 = vmatpush1.bf16.msra.mxu0 0
  %141 = vmatprep.subr.bf16.mxu0 0
  %142 = vmatpush1.bf16.msra.mxu0 0
  %143 = vmatprep.subr.bf16.mxu0 0
  %144 = vmatpush1.bf16.msra.mxu0 0
  %145 = vmatprep.subr.bf16.mxu0 0
  %146 = vmatpush1.bf16.msra.mxu0 0
  %147 = vmatprep.subr.bf16.mxu0 0
  %148 = vmatpush1.bf16.msra.mxu0 0
  %149 = vmatprep.subr.bf16.mxu0 0
  %150 = vmatpush1.bf16.msra.mxu0 0
  %151 = vmatprep.subr.bf16.mxu0 0
  %152 = vmatpush1.bf16.msra.mxu0 0
  %153 = vmatprep.mubr.bf16.mxu0 0
  %154 = vmatmul.mubr.bf16.gmra.mrb[0].mxu0 %v98
  %v155 = vpop.f32.mrb[0].mxu0
  %v156 = vadd.f32 0.0, %v155
  %v157 = vpop.f32.mrb[0].mxu0
  %v158 = vpop.f32.mrb[0].mxu0
  %v159 = vadd.f32 0.0, %v158
  %v160 = vpop.f32.mrb[0].mxu0
  %161 = vmatprep.mubr.bf16.mxu0 0
  %162 = vmatmul.mubr.bf16.gmra.mrb[0].mxu0 %v101
  %v163 = vpop.f32.mrb[0].mxu0
  %v164 = vadd.f32 0.0, %v163
  %v165 = vpop.f32.mrb[0].mxu0
  %v166 = vpop.f32.mrb[0].mxu0
  %v167 = vadd.f32 0.0, %v166
  %v168 = vpop.f32.mrb[0].mxu0
  %169 = vmatprep.mubr.bf16.mxu0 0
  %170 = vmatmul.mubr.bf16.gmra.mrb[0].mxu0 %v104
  %v171 = vpop.f32.mrb[0].mxu0
  %v172 = vadd.f32 0.0, %v171
  %v173 = vpop.f32.mrb[0].mxu0
  %v174 = vpop.f32.mrb[0].mxu0
  %v175 = vadd.f32 0.0, %v174
  %v176 = vpop.f32.mrb[0].mxu0
  %177 = vmatprep.mubr.bf16.mxu0 0
  %178 = vmatmul.mubr.bf16.gmra.mrb[0].mxu0 %v107
  %v179 = vpop.f32.mrb[0].mxu0
  %v180 = vadd.f32 0.0, %v179
  %v181 = vpop.f32.mrb[0].mxu0
  %v182 = vpop.f32.mrb[0].mxu0
  %v183 = vadd.f32 0.0, %v182
  %v184 = vpop.f32.mrb[0].mxu0
  %185 = vmatprep.mubr.bf16.mxu0 0
  %186 = vmatmul.mubr.bf16.gmra.mrb[0].mxu0 %v110
  %v187 = vpop.f32.mrb[0].mxu0
  %v188 = vadd.f32 0.0, %v187
  %v189 = vpop.f32.mrb[0].mxu0
  %v190 = vpop.f32.mrb[0].mxu0
  %v191 = vadd.f32 0.0, %v190
  %v192 = vpop.f32.mrb[0].mxu0
  %193 = vmatprep.mubr.bf16.mxu0 0
  %194 = vmatmul.mubr.bf16.gmra.mrb[0].mxu0 %v113
  %v195 = vpop.f32.mrb[0].mxu0
  %v196 = vadd.f32 0.0, %v195
  %v197 = vpop.f32.mrb[0].mxu0
  %v198 = vpop.f32.mrb[0].mxu0
  %v199 = vadd.f32 0.0, %v198
  %v200 = vpop.f32.mrb[0].mxu0
  %201 = vmatprep.mubr.bf16.mxu0 0
  %202 = vmatmul.mubr.bf16.gmra.mrb[0].mxu0 %v116
  %v203 = vpop.f32.mrb[0].mxu0
  %v204 = vadd.f32 0.0, %v203
  %v205 = vpop.f32.mrb[0].mxu0
  %v206 = vpop.f32.mrb[0].mxu0
  %v207 = vadd.f32 0.0, %v206
  %v208 = vpop.f32.mrb[0].mxu0
  %209 = vmatprep.mubr.bf16.mxu0 0
  %210 = vmatmul.mubr.bf16.gmra.mrb[0].mxu0 %v119
  %v211 = vpop.f32.mrb[0].mxu0
  %v212 = vadd.f32 0.0, %v211
  %v213 = vpop.f32.mrb[0].mxu0
  %v214 = vpop.f32.mrb[0].mxu0
  %v215 = vadd.f32 0.0, %v214
  %v216 = vpop.f32.mrb[0].mxu0
  %217 = vdwg.mxu0
  %v218 = vpack.c.bf16 %v159, %v156
  %v219 = vpack.c.bf16 %v167, %v164
  %v220 = vpack.c.bf16 %v175, %v172
  %v221 = vpack.c.bf16 %v183, %v180
  %v222 = vpack.c.bf16 %v191, %v188
  %v223 = vpack.c.bf16 %v199, %v196
  %v224 = vpack.c.bf16 %v207, %v204
  %v225 = vpack.c.bf16 %v215, %v212
  %226 = vst [vmem:[#allocation3] sm:$0xff] %v218
  %227 = vst [vmem:[#allocation3 + $0x8] sm:$0xff] %v219
  %228 = vst [vmem:[#allocation3 + $0x10] sm:$0xff] %v220
  %229 = vst [vmem:[#allocation3 + $0x18] sm:$0xff] %v221
  %230 = vst [vmem:[#allocation3 + $0x20] sm:$0xff] %v222
  %231 = vst [vmem:[#allocation3 + $0x28] sm:$0xff] %v223
  %232 = vst [vmem:[#allocation3 + $0x30] sm:$0xff] %v224
  %233 = vst [vmem:[#allocation3 + $0x38] sm:$0xff] %v225
  %v234 = vld [vmem:[%s3] sm:$0xf]
  %v235 = vld [vmem:[%s3 + $0x4] sm:$0xf]
  %v236 = vld [vmem:[%s3 + $0x8] sm:$0xf]
  %v237 = vld [vmem:[%s3 + $0xc] sm:$0xf]
  %v238 = vld [vmem:[%s4] sm:$0x1]
  %v239 = vld [vmem:[#allocation3] sm:$0xff]
  %v240 = vunpack.c.l.bf16 %v239
  %v241 = vunpack.c.h.bf16 %v239
  %v246 = vunpack.c.l.b16 %v234
  %v247 = vunpack.c.l.b16 %v235
  %v248 = vunpack.c.l.b16 %v236
  %v249 = vunpack.c.l.b16 %v237
  %v250 = vpack.c.b16 %v247, %v246
  %v251 = vpack.c.b16 %v249, %v248
  %v255 = vsel %vm96, 0, 0
  %257 = vmatprep.subr.bf16.mxu0 0
  %258 = vmatpush1.bf16.msra.mxu0 %v250
  %259 = vmatprep.subr.bf16.mxu0 0
  %260 = vmatpush1.bf16.msra.mxu0 %v251
  %261 = vmatprep.subr.bf16.mxu0 0
  %262 = vmatpush1.bf16.msra.mxu0 0
  %263 = vmatprep.subr.bf16.mxu0 0
  %264 = vmatpush1.bf16.msra.mxu0 0
  %265 = vmatprep.subr.bf16.mxu0 0
  %266 = vmatpush1.bf16.msra.mxu0 0
  %267 = vmatprep.subr.bf16.mxu0 0
  %268 = vmatpush1.bf16.msra.mxu0 0
  %269 = vmatprep.subr.bf16.mxu0 0
  %270 = vmatpush1.bf16.msra.mxu0 0
  %271 = vmatprep.subr.bf16.mxu0 0
  %272 = vmatpush1.bf16.msra.mxu0 0
  %273 = vmatprep.subr.bf16.mxu0 0
  %274 = vmatpush1.bf16.msra.mxu0 0
  %275 = vmatprep.subr.bf16.mxu0 0
  %276 = vmatpush1.bf16.msra.mxu0 0
  %277 = vmatprep.subr.bf16.mxu0 0
  %278 = vmatpush1.bf16.msra.mxu0 0
  %279 = vmatprep.subr.bf16.mxu0 0
  %280 = vmatpush1.bf16.msra.mxu0 0
  %281 = vmatprep.subr.bf16.mxu0 0
  %282 = vmatpush1.bf16.msra.mxu0 0
  %283 = vmatprep.subr.bf16.mxu0 0
  %284 = vmatpush1.bf16.msra.mxu0 0
  %285 = vmatprep.subr.bf16.mxu0 0
  %286 = vmatpush1.bf16.msra.mxu0 0
  %287 = vmatprep.subr.bf16.mxu0 0
  %288 = vmatpush1.bf16.msra.mxu0 0
  %289 = vmatprep.mubr.bf16.mxu0 0
  %290 = vmatmul.mubr.bf16.gmra.mrb[0].mxu0 %v255
  %v291 = vpop.f32.mrb[0].mxu0
  %v292 = vadd.f32 %v240, %v291
  %v293 = vpop.f32.mrb[0].mxu0
  %v294 = vpop.f32.mrb[0].mxu0
  %v295 = vadd.f32 %v241, %v294
  %v296 = vpop.f32.mrb[0].mxu0
  %297 = vdwg.mxu0
  %v299 = vlaneseq
  %v300 = vshrl.u32 %v299, 7
  %v301 = vsub.s32 0, %v300
  %v302 = vrot.slane %v238, %v301
  %v304 = vadd.f32 %v292, %v302
  %v305 = vadd.f32 %v295, %v302
  %v306 = vxor.u32 %v304, 2147483648
  %v307 = vxor.u32 %v305, 2147483648
  %v308 = vmul.f32 %v306, 1.442695
  %v309 = vpow.pop %v308
  %v310 = vmul.f32 %v307, 1.442695
  %v311 = vpow.pop %v310
  %v312 = vadd.f32 %v309, 1.0
  %v313 = vadd.f32 %v311, 1.0
  %v314 = vrcp.pop %v312
  %v315 = vmul.f32 1.0, %v314
  %v316 = vrcp.pop %v313
  %v317 = vmul.f32 1.0, %v316
  %v318 = vtanh.pop %v304
  %v319 = vtanh.pop %v305
  %v320 = vmul.f32 %v315, 0.0
  %v321 = vmul.f32 %v317, 0.0
  %324 = vrot.lane.b32.xlu0 %v318, 64
  %v325 = vpop.permute.xlu0 %324
  %326 = vrot.lane.b32.xlu0 %v319, 64
  %v327 = vpop.permute.xlu0 %326
  %v330 = vmul.f32 %v315, %v325
  %v331 = vmul.f32 %v317, %v327
  %334 = vrot.lane.b32.xlu0 %v330, 32
  %v335 = vpop.permute.xlu0 %334
  %336 = vrot.lane.b32.xlu0 %v331, 32
  %v337 = vpop.permute.xlu0 %336
  %v340 = vadd.f32 %v320, %v335
  %v341 = vadd.f32 %v321, %v337
  %v342 = vtanh.pop %v340
  %v343 = vtanh.pop %v341
  %346 = vrot.lane.b32.xlu0 %v342, 64
  %v347 = vpop.permute.xlu0 %346
  %348 = vrot.lane.b32.xlu0 %v343, 64
  %v349 = vpop.permute.xlu0 %348
  %v352 = vmul.f32 %v315, %v347
  %v353 = vmul.f32 %v317, %v349
  %v354 = vpack.c.bf16 %v353, %v352
  %356 = vrot.lane.b32.xlu0 %v354, 32
  %v357 = vpop.permute.xlu0 %356
  %359 = vst.msk [vmem:[#allocation2] sm:$0xff] %vm96, %v357
  %v360 = vld [vmem:[#allocation3 + $0x8] sm:$0xff]
  %v361 = vunpack.c.l.bf16 %v360
  %v362 = vunpack.c.h.bf16 %v360
  %v364 = vsel %vm96, %v357, 0
  %366 = vmatprep.subr.bf16.mxu0 0
  %367 = vmatpush1.bf16.msra.mxu0 %v250
  %368 = vmatprep.subr.bf16.mxu0 0
  %369 = vmatpush1.bf16.msra.mxu0 %v251
  %370 = vmatprep.subr.bf16.mxu0 0
  %371 = vmatpush1.bf16.msra.mxu0 0
  %372 = vmatprep.subr.bf16.mxu0 0
  %373 = vmatpush1.bf16.msra.mxu0 0
  %374 = vmatprep.subr.bf16.mxu0 0
  %375 = vmatpush1.bf16.msra.mxu0 0
  %376 = vmatprep.subr.bf16.mxu0 0
  %377 = vmatpush1.bf16.msra.mxu0 0
  %378 = vmatprep.subr.bf16.mxu0 0
  %379 = vmatpush1.bf16.msra.mxu0 0
  %380 = vmatprep.subr.bf16.mxu0 0
  %381 = vmatpush1.bf16.msra.mxu0 0
  %382 = vmatprep.subr.bf16.mxu0 0
  %383 = vmatpush1.bf16.msra.mxu0 0
  %384 = vmatprep.subr.bf16.mxu0 0
  %385 = vmatpush1.bf16.msra.mxu0 0
  %386 = vmatprep.subr.bf16.mxu0 0
  %387 = vmatpush1.bf16.msra.mxu0 0
  %388 = vmatprep.subr.bf16.mxu0 0
  %389 = vmatpush1.bf16.msra.mxu0 0
  %390 = vmatprep.subr.bf16.mxu0 0
  %391 = vmatpush1.bf16.msra.mxu0 0
  %392 = vmatprep.subr.bf16.mxu0 0
  %393 = vmatpush1.bf16.msra.mxu0 0
  %394 = vmatprep.subr.bf16.mxu0 0
  %395 = vmatpush1.bf16.msra.mxu0 0
  %396 = vmatprep.subr.bf16.mxu0 0
  %397 = vmatpush1.bf16.msra.mxu0 0
  %398 = vmatprep.mubr.bf16.mxu0 0
  %399 = vmatmul.mubr.bf16.gmra.mrb[0].mxu0 %v364
  %v400 = vpop.f32.mrb[0].mxu0
  %v401 = vadd.f32 %v361, %v400
  %v402 = vpop.f32.mrb[0].mxu0
  %v403 = vpop.f32.mrb[0].mxu0
  %v404 = vadd.f32 %v362, %v403
  %v405 = vpop.f32.mrb[0].mxu0
  %406 = vdwg.mxu0
  %v407 = vadd.f32 %v401, %v302
  %v408 = vadd.f32 %v404, %v302
  %v409 = vxor.u32 %v407, 2147483648
  %v410 = vxor.u32 %v408, 2147483648
  %v411 = vmul.f32 %v409, 1.442695
  %v412 = vpow.pop %v411
  %v413 = vmul.f32 %v410, 1.442695
  %v414 = vpow.pop %v413
  %v415 = vadd.f32 %v412, 1.0
  %v416 = vadd.f32 %v414, 1.0
  %v417 = vrcp.pop %v415
  %v418 = vmul.f32 1.0, %v417
  %v419 = vrcp.pop %v416
  %v420 = vmul.f32 1.0, %v419
  %v421 = vtanh.pop %v407
  %v422 = vtanh.pop %v408
  %v423 = vmul.f32 %v418, %v340
  %v424 = vmul.f32 %v420, %v341
  %427 = vrot.lane.b32.xlu0 %v421, 64
  %v428 = vpop.permute.xlu0 %427
  %429 = vrot.lane.b32.xlu0 %v422, 64
  %v430 = vpop.permute.xlu0 %429
  %v433 = vmul.f32 %v418, %v428
  %v434 = vmul.f32 %v420, %v430
  %437 = vrot.lane.b32.xlu0 %v433, 32
  %v438 = vpop.permute.xlu0 %437
  %439 = vrot.lane.b32.xlu0 %v434, 32
  %v440 = vpop.permute.xlu0 %439
  %v443 = vadd.f32 %v423, %v438
  %v444 = vadd.f32 %v424, %v440
  %v445 = vtanh.pop %v443
  %v446 = vtanh.pop %v444
  %449 = vrot.lane.b32.xlu0 %v445, 64
  %v450 = vpop.permute.xlu0 %449
  %451 = vrot.lane.b32.xlu0 %v446, 64
  %v452 = vpop.permute.xlu0 %451
  %v455 = vmul.f32 %v418, %v450
  %v456 = vmul.f32 %v420, %v452
  %v457 = vpack.c.bf16 %v456, %v455
  %459 = vrot.lane.b32.xlu0 %v457, 32
  %v460 = vpop.permute.xlu0 %459
  %462 = vst.msk [vmem:[#allocation2 + $0x8] sm:$0xff] %vm96, %v460
  %v463 = vld [vmem:[#allocation3 + $0x10] sm:$0xff]
  %v464 = vunpack.c.l.bf16 %v463
  %v465 = vunpack.c.h.bf16 %v463
  %v467 = vsel %vm96, %v460, 0
  %469 = vmatprep.subr.bf16.mxu0 0
  %470 = vmatpush1.bf16.msra.mxu0 %v250
  %471 = vmatprep.subr.bf16.mxu0 0
  %472 = vmatpush1.bf16.msra.mxu0 %v251
  %473 = vmatprep.subr.bf16.mxu0 0
  %474 = vmatpush1.bf16.msra.mxu0 0
  %475 = vmatprep.subr.bf16.mxu0 0
  %476 = vmatpush1.bf16.msra.mxu0 0
  %477 = vmatprep.subr.bf16.mxu0 0
  %478 = vmatpush1.bf16.msra.mxu0 0
  %479 = vmatprep.subr.bf16.mxu0 0
  %480 = vmatpush1.bf16.msra.mxu0 0
  %481 = vmatprep.subr.bf16.mxu0 0
  %482 = vmatpush1.bf16.msra.mxu0 0
  %483 = vmatprep.subr.bf16.mxu0 0
  %484 = vmatpush1.bf16.msra.mxu0 0
  %485 = vmatprep.subr.bf16.mxu0 0
  %486 = vmatpush1.bf16.msra.mxu0 0
  %487 = vmatprep.subr.bf16.mxu0 0
  %488 = vmatpush1.bf16.msra.mxu0 0
  %489 = vmatprep.subr.bf16.mxu0 0
  %490 = vmatpush1.bf16.msra.mxu0 0
  %491 = vmatprep.subr.bf16.mxu0 0
  %492 = vmatpush1.bf16.msra.mxu0 0
  %493 = vmatprep.subr.bf16.mxu0 0
  %494 = vmatpush1.bf16.msra.mxu0 0
  %495 = vmatprep.subr.bf16.mxu0 0
  %496 = vmatpush1.bf16.msra.mxu0 0
  %497 = vmatprep.subr.bf16.mxu0 0
  %498 = vmatpush1.bf16.msra.mxu0 0
  %499 = vmatprep.subr.bf16.mxu0 0
  %500 = vmatpush1.bf16.msra.mxu0 0
  %501 = vmatprep.mubr.bf16.mxu0 0
  %502 = vmatmul.mubr.bf16.gmra.mrb[0].mxu0 %v467
  %v503 = vpop.f32.mrb[0].mxu0
  %v504 = vadd.f32 %v464, %v503
  %v505 = vpop.f32.mrb[0].mxu0
  %v506 = vpop.f32.mrb[0].mxu0
  %v507 = vadd.f32 %v465, %v506
  %v508 = vpop.f32.mrb[0].mxu0
  %509 = vdwg.mxu0
  %v510 = vadd.f32 %v504, %v302
  %v511 = vadd.f32 %v507, %v302
  %v512 = vxor.u32 %v510, 2147483648
  %v513 = vxor.u32 %v511, 2147483648
  %v514 = vmul.f32 %v512, 1.442695
  %v515 = vpow.pop %v514
  %v516 = vmul.f32 %v513, 1.442695
  %v517 = vpow.pop %v516
  %v518 = vadd.f32 %v515, 1.0
  %v519 = vadd.f32 %v517, 1.0
  %v520 = vrcp.pop %v518
  %v521 = vmul.f32 1.0, %v520
  %v522 = vrcp.pop %v519
  %v523 = vmul.f32 1.0, %v522
  %v524 = vtanh.pop %v510
  %v525 = vtanh.pop %v511
  %v526 = vmul.f32 %v521, %v443
  %v527 = vmul.f32 %v523, %v444
  %530 = vrot.lane.b32.xlu0 %v524, 64
  %v531 = vpop.permute.xlu0 %530
  %532 = vrot.lane.b32.xlu0 %v525, 64
  %v533 = vpop.permute.xlu0 %532
  %v536 = vmul.f32 %v521, %v531
  %v537 = vmul.f32 %v523, %v533
  %540 = vrot.lane.b32.xlu0 %v536, 32
  %v541 = vpop.permute.xlu0 %540
  %542 = vrot.lane.b32.xlu0 %v537, 32
  %v543 = vpop.permute.xlu0 %542
  %v546 = vadd.f32 %v526, %v541
  %v547 = vadd.f32 %v527, %v543
  %v548 = vtanh.pop %v546
  %v549 = vtanh.pop %v547
  %552 = vrot.lane.b32.xlu0 %v548, 64
  %v553 = vpop.permute.xlu0 %552
  %554 = vrot.lane.b32.xlu0 %v549, 64
  %v555 = vpop.permute.xlu0 %554
  %v558 = vmul.f32 %v521, %v553
  %v559 = vmul.f32 %v523, %v555
  %v560 = vpack.c.bf16 %v559, %v558
  %562 = vrot.lane.b32.xlu0 %v560, 32
  %v563 = vpop.permute.xlu0 %562
  %565 = vst.msk [vmem:[#allocation2 + $0x10] sm:$0xff] %vm96, %v563
  %v566 = vld [vmem:[#allocation3 + $0x18] sm:$0xff]
  %v567 = vunpack.c.l.bf16 %v566
  %v568 = vunpack.c.h.bf16 %v566
  %v570 = vsel %vm96, %v563, 0
  %572 = vmatprep.subr.bf16.mxu0 0
  %573 = vmatpush1.bf16.msra.mxu0 %v250
  %574 = vmatprep.subr.bf16.mxu0 0
  %575 = vmatpush1.bf16.msra.mxu0 %v251
  %576 = vmatprep.subr.bf16.mxu0 0
  %577 = vmatpush1.bf16.msra.mxu0 0
  %578 = vmatprep.subr.bf16.mxu0 0
  %579 = vmatpush1.bf16.msra.mxu0 0
  %580 = vmatprep.subr.bf16.mxu0 0
  %581 = vmatpush1.bf16.msra.mxu0 0
  %582 = vmatprep.subr.bf16.mxu0 0
  %583 = vmatpush1.bf16.msra.mxu0 0
  %584 = vmatprep.subr.bf16.mxu0 0
  %585 = vmatpush1.bf16.msra.mxu0 0
  %586 = vmatprep.subr.bf16.mxu0 0
  %587 = vmatpush1.bf16.msra.mxu0 0
  %588 = vmatprep.subr.bf16.mxu0 0
  %589 = vmatpush1.bf16.msra.mxu0 0
  %590 = vmatprep.subr.bf16.mxu0 0
  %591 = vmatpush1.bf16.msra.mxu0 0
  %592 = vmatprep.subr.bf16.mxu0 0
  %593 = vmatpush1.bf16.msra.mxu0 0
  %594 = vmatprep.subr.bf16.mxu0 0
  %595 = vmatpush1.bf16.msra.mxu0 0
  %596 = vmatprep.subr.bf16.mxu0 0
  %597 = vmatpush1.bf16.msra.mxu0 0
  %598 = vmatprep.subr.bf16.mxu0 0
  %599 = vmatpush1.bf16.msra.mxu0 0
  %600 = vmatprep.subr.bf16.mxu0 0
  %601 = vmatpush1.bf16.msra.mxu0 0
  %602 = vmatprep.subr.bf16.mxu0 0
  %603 = vmatpush1.bf16.msra.mxu0 0
  %604 = vmatprep.mubr.bf16.mxu0 0
  %605 = vmatmul.mubr.bf16.gmra.mrb[0].mxu0 %v570
  %v606 = vpop.f32.mrb[0].mxu0
  %v607 = vadd.f32 %v567, %v606
  %v608 = vpop.f32.mrb[0].mxu0
  %v609 = vpop.f32.mrb[0].mxu0
  %v610 = vadd.f32 %v568, %v609
  %v611 = vpop.f32.mrb[0].mxu0
  %612 = vdwg.mxu0
  %v613 = vadd.f32 %v607, %v302
  %v614 = vadd.f32 %v610, %v302
  %v615 = vxor.u32 %v613, 2147483648
  %v616 = vxor.u32 %v614, 2147483648
  %v617 = vmul.f32 %v615, 1.442695
  %v618 = vpow.pop %v617
  %v619 = vmul.f32 %v616, 1.442695
  %v620 = vpow.pop %v619
  %v621 = vadd.f32 %v618, 1.0
  %v622 = vadd.f32 %v620, 1.0
  %v623 = vrcp.pop %v621
  %v624 = vmul.f32 1.0, %v623
  %v625 = vrcp.pop %v622
  %v626 = vmul.f32 1.0, %v625
  %v627 = vtanh.pop %v613
  %v628 = vtanh.pop %v614
  %v629 = vmul.f32 %v624, %v546
  %v630 = vmul.f32 %v626, %v547
  %633 = vrot.lane.b32.xlu0 %v627, 64
  %v634 = vpop.permute.xlu0 %633
  %635 = vrot.lane.b32.xlu0 %v628, 64
  %v636 = vpop.permute.xlu0 %635
  %v639 = vmul.f32 %v624, %v634
  %v640 = vmul.f32 %v626, %v636
  %643 = vrot.lane.b32.xlu0 %v639, 32
  %v644 = vpop.permute.xlu0 %643
  %645 = vrot.lane.b32.xlu0 %v640, 32
  %v646 = vpop.permute.xlu0 %645
  %v649 = vadd.f32 %v629, %v644
  %v650 = vadd.f32 %v630, %v646
  %v651 = vtanh.pop %v649
  %v652 = vtanh.pop %v650
  %655 = vrot.lane.b32.xlu0 %v651, 64
  %v656 = vpop.permute.xlu0 %655
  %657 = vrot.lane.b32.xlu0 %v652, 64
  %v658 = vpop.permute.xlu0 %657
  %v661 = vmul.f32 %v624, %v656
  %v662 = vmul.f32 %v626, %v658
  %v663 = vpack.c.bf16 %v662, %v661
  %665 = vrot.lane.b32.xlu0 %v663, 32
  %v666 = vpop.permute.xlu0 %665
  %668 = vst.msk [vmem:[#allocation2 + $0x18] sm:$0xff] %vm96, %v666
  %v669 = vld [vmem:[#allocation3 + $0x20] sm:$0xff]
  %v670 = vunpack.c.l.bf16 %v669
  %v671 = vunpack.c.h.bf16 %v669
  %v673 = vsel %vm96, %v666, 0
  %675 = vmatprep.subr.bf16.mxu0 0
  %676 = vmatpush1.bf16.msra.mxu0 %v250
  %677 = vmatprep.subr.bf16.mxu0 0
  %678 = vmatpush1.bf16.msra.mxu0 %v251
  %679 = vmatprep.subr.bf16.mxu0 0
  %680 = vmatpush1.bf16.msra.mxu0 0
  %681 = vmatprep.subr.bf16.mxu0 0
  %682 = vmatpush1.bf16.msra.mxu0 0
  %683 = vmatprep.subr.bf16.mxu0 0
  %684 = vmatpush1.bf16.msra.mxu0 0
  %685 = vmatprep.subr.bf16.mxu0 0
  %686 = vmatpush1.bf16.msra.mxu0 0
  %687 = vmatprep.subr.bf16.mxu0 0
  %688 = vmatpush1.bf16.msra.mxu0 0
  %689 = vmatprep.subr.bf16.mxu0 0
  %690 = vmatpush1.bf16.msra.mxu0 0
  %691 = vmatprep.subr.bf16.mxu0 0
  %692 = vmatpush1.bf16.msra.mxu0 0
  %693 = vmatprep.subr.bf16.mxu0 0
  %694 = vmatpush1.bf16.msra.mxu0 0
  %695 = vmatprep.subr.bf16.mxu0 0
  %696 = vmatpush1.bf16.msra.mxu0 0
  %697 = vmatprep.subr.bf16.mxu0 0
  %698 = vmatpush1.bf16.msra.mxu0 0
  %699 = vmatprep.subr.bf16.mxu0 0
  %700 = vmatpush1.bf16.msra.mxu0 0
  %701 = vmatprep.subr.bf16.mxu0 0
  %702 = vmatpush1.bf16.msra.mxu0 0
  %703 = vmatprep.subr.bf16.mxu0 0
  %704 = vmatpush1.bf16.msra.mxu0 0
  %705 = vmatprep.subr.bf16.mxu0 0
  %706 = vmatpush1.bf16.msra.mxu0 0
  %707 = vmatprep.mubr.bf16.mxu0 0
  %708 = vmatmul.mubr.bf16.gmra.mrb[0].mxu0 %v673
  %v709 = vpop.f32.mrb[0].mxu0
  %v710 = vadd.f32 %v670, %v709
  %v711 = vpop.f32.mrb[0].mxu0
  %v712 = vpop.f32.mrb[0].mxu0
  %v713 = vadd.f32 %v671, %v712
  %v714 = vpop.f32.mrb[0].mxu0
  %715 = vdwg.mxu0
  %v716 = vadd.f32 %v710, %v302
  %v717 = vadd.f32 %v713, %v302
  %v718 = vxor.u32 %v716, 2147483648
  %v719 = vxor.u32 %v717, 2147483648
  %v720 = vmul.f32 %v718, 1.442695
  %v721 = vpow.pop %v720
  %v722 = vmul.f32 %v719, 1.442695
  %v723 = vpow.pop %v722
  %v724 = vadd.f32 %v721, 1.0
  %v725 = vadd.f32 %v723, 1.0
  %v726 = vrcp.pop %v724
  %v727 = vmul.f32 1.0, %v726
  %v728 = vrcp.pop %v725
  %v729 = vmul.f32 1.0, %v728
  %v730 = vtanh.pop %v716
  %v731 = vtanh.pop %v717
  %v732 = vmul.f32 %v727, %v649
  %v733 = vmul.f32 %v729, %v650
  %736 = vrot.lane.b32.xlu0 %v730, 64
  %v737 = vpop.permute.xlu0 %736
  %738 = vrot.lane.b32.xlu0 %v731, 64
  %v739 = vpop.permute.xlu0 %738
  %v742 = vmul.f32 %v727, %v737
  %v743 = vmul.f32 %v729, %v739
  %746 = vrot.lane.b32.xlu0 %v742, 32
  %v747 = vpop.permute.xlu0 %746
  %748 = vrot.lane.b32.xlu0 %v743, 32
  %v749 = vpop.permute.xlu0 %748
  %v752 = vadd.f32 %v732, %v747
  %v753 = vadd.f32 %v733, %v749
  %v754 = vtanh.pop %v752
  %v755 = vtanh.pop %v753
  %758 = vrot.lane.b32.xlu0 %v754, 64
  %v759 = vpop.permute.xlu0 %758
  %760 = vrot.lane.b32.xlu0 %v755, 64
  %v761 = vpop.permute.xlu0 %760
  %v764 = vmul.f32 %v727, %v759
  %v765 = vmul.f32 %v729, %v761
  %v766 = vpack.c.bf16 %v765, %v764
  %768 = vrot.lane.b32.xlu0 %v766, 32
  %v769 = vpop.permute.xlu0 %768
  %771 = vst.msk [vmem:[#allocation2 + $0x20] sm:$0xff] %vm96, %v769
  %v772 = vld [vmem:[#allocation3 + $0x28] sm:$0xff]
  %v773 = vunpack.c.l.bf16 %v772
  %v774 = vunpack.c.h.bf16 %v772
  %v776 = vsel %vm96, %v769, 0
  %778 = vmatprep.subr.bf16.mxu0 0
  %779 = vmatpush1.bf16.msra.mxu0 %v250
  %780 = vmatprep.subr.bf16.mxu0 0
  %781 = vmatpush1.bf16.msra.mxu0 %v251
  %782 = vmatprep.subr.bf16.mxu0 0
  %783 = vmatpush1.bf16.msra.mxu0 0
  %784 = vmatprep.subr.bf16.mxu0 0
  %785 = vmatpush1.bf16.msra.mxu0 0
  %786 = vmatprep.subr.bf16.mxu0 0
  %787 = vmatpush1.bf16.msra.mxu0 0
  %788 = vmatprep.subr.bf16.mxu0 0
  %789 = vmatpush1.bf16.msra.mxu0 0
  %790 = vmatprep.subr.bf16.mxu0 0
  %791 = vmatpush1.bf16.msra.mxu0 0
  %792 = vmatprep.subr.bf16.mxu0 0
  %793 = vmatpush1.bf16.msra.mxu0 0
  %794 = vmatprep.subr.bf16.mxu0 0
  %795 = vmatpush1.bf16.msra.mxu0 0
  %796 = vmatprep.subr.bf16.mxu0 0
  %797 = vmatpush1.bf16.msra.mxu0 0
  %798 = vmatprep.subr.bf16.mxu0 0
  %799 = vmatpush1.bf16.msra.mxu0 0
  %800 = vmatprep.subr.bf16.mxu0 0
  %801 = vmatpush1.bf16.msra.mxu0 0
  %802 = vmatprep.subr.bf16.mxu0 0
  %803 = vmatpush1.bf16.msra.mxu0 0
  %804 = vmatprep.subr.bf16.mxu0 0
  %805 = vmatpush1.bf16.msra.mxu0 0
  %806 = vmatprep.subr.bf16.mxu0 0
  %807 = vmatpush1.bf16.msra.mxu0 0
  %808 = vmatprep.subr.bf16.mxu0 0
  %809 = vmatpush1.bf16.msra.mxu0 0
  %810 = vmatprep.mubr.bf16.mxu0 0
  %811 = vmatmul.mubr.bf16.gmra.mrb[0].mxu0 %v776
  %v812 = vpop.f32.mrb[0].mxu0
  %v813 = vadd.f32 %v773, %v812
  %v814 = vpop.f32.mrb[0].mxu0
  %v815 = vpop.f32.mrb[0].mxu0
  %v816 = vadd.f32 %v774, %v815
  %v817 = vpop.f32.mrb[0].mxu0
  %818 = vdwg.mxu0
  %v819 = vadd.f32 %v813, %v302
  %v820 = vadd.f32 %v816, %v302
  %v821 = vxor.u32 %v819, 2147483648
  %v822 = vxor.u32 %v820, 2147483648
  %v823 = vmul.f32 %v821, 1.442695
  %v824 = vpow.pop %v823
  %v825 = vmul.f32 %v822, 1.442695
  %v826 = vpow.pop %v825
  %v827 = vadd.f32 %v824, 1.0
  %v828 = vadd.f32 %v826, 1.0
  %v829 = vrcp.pop %v827
  %v830 = vmul.f32 1.0, %v829
  %v831 = vrcp.pop %v828
  %v832 = vmul.f32 1.0, %v831
  %v833 = vtanh.pop %v819
  %v834 = vtanh.pop %v820
  %v835 = vmul.f32 %v830, %v752
  %v836 = vmul.f32 %v832, %v753
  %839 = vrot.lane.b32.xlu0 %v833, 64
  %v840 = vpop.permute.xlu0 %839
  %841 = vrot.lane.b32.xlu0 %v834, 64
  %v842 = vpop.permute.xlu0 %841
  %v845 = vmul.f32 %v830, %v840
  %v846 = vmul.f32 %v832, %v842
  %849 = vrot.lane.b32.xlu0 %v845, 32
  %v850 = vpop.permute.xlu0 %849
  %851 = vrot.lane.b32.xlu0 %v846, 32
  %v852 = vpop.permute.xlu0 %851
  %v855 = vadd.f32 %v835, %v850
  %v856 = vadd.f32 %v836, %v852
  %v857 = vtanh.pop %v855
  %v858 = vtanh.pop %v856
  %861 = vrot.lane.b32.xlu0 %v857, 64
  %v862 = vpop.permute.xlu0 %861
  %863 = vrot.lane.b32.xlu0 %v858, 64
  %v864 = vpop.permute.xlu0 %863
  %v867 = vmul.f32 %v830, %v862
  %v868 = vmul.f32 %v832, %v864
  %v869 = vpack.c.bf16 %v868, %v867
  %871 = vrot.lane.b32.xlu0 %v869, 32
  %v872 = vpop.permute.xlu0 %871
  %874 = vst.msk [vmem:[#allocation2 + $0x28] sm:$0xff] %vm96, %v872
  %v875 = vld [vmem:[#allocation3 + $0x30] sm:$0xff]
  %v876 = vunpack.c.l.bf16 %v875
  %v877 = vunpack.c.h.bf16 %v875
  %v879 = vsel %vm96, %v872, 0
  %881 = vmatprep.subr.bf16.mxu0 0
  %882 = vmatpush1.bf16.msra.mxu0 %v250
  %883 = vmatprep.subr.bf16.mxu0 0
  %884 = vmatpush1.bf16.msra.mxu0 %v251
  %885 = vmatprep.subr.bf16.mxu0 0
  %886 = vmatpush1.bf16.msra.mxu0 0
  %887 = vmatprep.subr.bf16.mxu0 0
  %888 = vmatpush1.bf16.msra.mxu0 0
  %889 = vmatprep.subr.bf16.mxu0 0
  %890 = vmatpush1.bf16.msra.mxu0 0
  %891 = vmatprep.subr.bf16.mxu0 0
  %892 = vmatpush1.bf16.msra.mxu0 0
  %893 = vmatprep.subr.bf16.mxu0 0
  %894 = vmatpush1.bf16.msra.mxu0 0
  %895 = vmatprep.subr.bf16.mxu0 0
  %896 = vmatpush1.bf16.msra.mxu0 0
  %897 = vmatprep.subr.bf16.mxu0 0
  %898 = vmatpush1.bf16.msra.mxu0 0
  %899 = vmatprep.subr.bf16.mxu0 0
  %900 = vmatpush1.bf16.msra.mxu0 0
  %901 = vmatprep.subr.bf16.mxu0 0
  %902 = vmatpush1.bf16.msra.mxu0 0
  %903 = vmatprep.subr.bf16.mxu0 0
  %904 = vmatpush1.bf16.msra.mxu0 0
  %905 = vmatprep.subr.bf16.mxu0 0
  %906 = vmatpush1.bf16.msra.mxu0 0
  %907 = vmatprep.subr.bf16.mxu0 0
  %908 = vmatpush1.bf16.msra.mxu0 0
  %909 = vmatprep.subr.bf16.mxu0 0
  %910 = vmatpush1.bf16.msra.mxu0 0
  %911 = vmatprep.subr.bf16.mxu0 0
  %912 = vmatpush1.bf16.msra.mxu0 0
  %913 = vmatprep.mubr.bf16.mxu0 0
  %914 = vmatmul.mubr.bf16.gmra.mrb[0].mxu0 %v879
  %v915 = vpop.f32.mrb[0].mxu0
  %v916 = vadd.f32 %v876, %v915
  %v917 = vpop.f32.mrb[0].mxu0
  %v918 = vpop.f32.mrb[0].mxu0
  %v919 = vadd.f32 %v877, %v918
  %v920 = vpop.f32.mrb[0].mxu0
  %921 = vdwg.mxu0
  %v922 = vadd.f32 %v916, %v302
  %v923 = vadd.f32 %v919, %v302
  %v924 = vxor.u32 %v922, 2147483648
  %v925 = vxor.u32 %v923, 2147483648
  %v926 = vmul.f32 %v924, 1.442695
  %v927 = vpow.pop %v926
  %v928 = vmul.f32 %v925, 1.442695
  %v929 = vpow.pop %v928
  %v930 = vadd.f32 %v927, 1.0
  %v931 = vadd.f32 %v929, 1.0
  %v932 = vrcp.pop %v930
  %v933 = vmul.f32 1.0, %v932
  %v934 = vrcp.pop %v931
  %v935 = vmul.f32 1.0, %v934
  %v936 = vtanh.pop %v922
  %v937 = vtanh.pop %v923
  %v938 = vmul.f32 %v933, %v855
  %v939 = vmul.f32 %v935, %v856
  %942 = vrot.lane.b32.xlu0 %v936, 64
  %v943 = vpop.permute.xlu0 %942
  %944 = vrot.lane.b32.xlu0 %v937, 64
  %v945 = vpop.permute.xlu0 %944
  %v948 = vmul.f32 %v933, %v943
  %v949 = vmul.f32 %v935, %v945
  %952 = vrot.lane.b32.xlu0 %v948, 32
  %v953 = vpop.permute.xlu0 %952
  %954 = vrot.lane.b32.xlu0 %v949, 32
  %v955 = vpop.permute.xlu0 %954
  %v958 = vadd.f32 %v938, %v953
  %v959 = vadd.f32 %v939, %v955
  %v960 = vtanh.pop %v958
  %v961 = vtanh.pop %v959
  %964 = vrot.lane.b32.xlu0 %v960, 64
  %v965 = vpop.permute.xlu0 %964
  %966 = vrot.lane.b32.xlu0 %v961, 64
  %v967 = vpop.permute.xlu0 %966
  %v970 = vmul.f32 %v933, %v965
  %v971 = vmul.f32 %v935, %v967
  %v972 = vpack.c.bf16 %v971, %v970
  %974 = vrot.lane.b32.xlu0 %v972, 32
  %v975 = vpop.permute.xlu0 %974
  %977 = vst.msk [vmem:[#allocation2 + $0x30] sm:$0xff] %vm96, %v975
  %v978 = vld [vmem:[#allocation3 + $0x38] sm:$0xff]
  %v979 = vunpack.c.l.bf16 %v978
  %v980 = vunpack.c.h.bf16 %v978
  %v982 = vsel %vm96, %v975, 0
  %984 = vmatprep.subr.bf16.mxu0 0
  %985 = vmatpush1.bf16.msra.mxu0 %v250
  %986 = vmatprep.subr.bf16.mxu0 0
  %987 = vmatpush1.bf16.msra.mxu0 %v251
  %988 = vmatprep.subr.bf16.mxu0 0
  %989 = vmatpush1.bf16.msra.mxu0 0
  %990 = vmatprep.subr.bf16.mxu0 0
  %991 = vmatpush1.bf16.msra.mxu0 0
  %992 = vmatprep.subr.bf16.mxu0 0
  %993 = vmatpush1.bf16.msra.mxu0 0
  %994 = vmatprep.subr.bf16.mxu0 0
  %995 = vmatpush1.bf16.msra.mxu0 0
  %996 = vmatprep.subr.bf16.mxu0 0
  %997 = vmatpush1.bf16.msra.mxu0 0
  %998 = vmatprep.subr.bf16.mxu0 0
  %999 = vmatpush1.bf16.msra.mxu0 0
  %1000 = vmatprep.subr.bf16.mxu0 0
  %1001 = vmatpush1.bf16.msra.mxu0 0
  %1002 = vmatprep.subr.bf16.mxu0 0
  %1003 = vmatpush1.bf16.msra.mxu0 0
  %1004 = vmatprep.subr.bf16.mxu0 0
  %1005 = vmatpush1.bf16.msra.mxu0 0
  %1006 = vmatprep.subr.bf16.mxu0 0
  %1007 = vmatpush1.bf16.msra.mxu0 0
  %1008 = vmatprep.subr.bf16.mxu0 0
  %1009 = vmatpush1.bf16.msra.mxu0 0
  %1010 = vmatprep.subr.bf16.mxu0 0
  %1011 = vmatpush1.bf16.msra.mxu0 0
  %1012 = vmatprep.subr.bf16.mxu0 0
  %1013 = vmatpush1.bf16.msra.mxu0 0
  %1014 = vmatprep.subr.bf16.mxu0 0
  %1015 = vmatpush1.bf16.msra.mxu0 0
  %1016 = vmatprep.mubr.bf16.mxu0 0
  %1017 = vmatmul.mubr.bf16.gmra.mrb[0].mxu0 %v982
  %v1018 = vpop.f32.mrb[0].mxu0
  %v1019 = vadd.f32 %v979, %v1018
  %v1020 = vpop.f32.mrb[0].mxu0
  %v1021 = vpop.f32.mrb[0].mxu0
  %v1022 = vadd.f32 %v980, %v1021
  %v1023 = vpop.f32.mrb[0].mxu0
  %1024 = vdwg.mxu0
  %v1025 = vadd.f32 %v1019, %v302
  %v1026 = vadd.f32 %v1022, %v302
  %v1027 = vxor.u32 %v1025, 2147483648
  %v1028 = vxor.u32 %v1026, 2147483648
  %v1029 = vmul.f32 %v1027, 1.442695
  %v1030 = vpow.pop %v1029
  %v1031 = vmul.f32 %v1028, 1.442695
  %v1032 = vpow.pop %v1031
  %v1033 = vadd.f32 %v1030, 1.0
  %v1034 = vadd.f32 %v1032, 1.0
  %v1035 = vrcp.pop %v1033
  %v1036 = vmul.f32 1.0, %v1035
  %v1037 = vrcp.pop %v1034
  %v1038 = vmul.f32 1.0, %v1037
  %v1039 = vtanh.pop %v1025
  %v1040 = vtanh.pop %v1026
  %v1041 = vmul.f32 %v1036, %v958
  %v1042 = vmul.f32 %v1038, %v959
  %1045 = vrot.lane.b32.xlu0 %v1039, 64
  %v1046 = vpop.permute.xlu0 %1045
  %1047 = vrot.lane.b32.xlu0 %v1040, 64
  %v1048 = vpop.permute.xlu0 %1047
  %v1051 = vmul.f32 %v1036, %v1046
  %v1052 = vmul.f32 %v1038, %v1048
  %1055 = vrot.lane.b32.xlu0 %v1051, 32
  %v1056 = vpop.permute.xlu0 %1055
  %1057 = vrot.lane.b32.xlu0 %v1052, 32
  %v1058 = vpop.permute.xlu0 %1057
  %v1061 = vadd.f32 %v1041, %v1056
  %v1062 = vadd.f32 %v1042, %v1058
  %v1063 = vtanh.pop %v1061
  %v1064 = vtanh.pop %v1062
  %1067 = vrot.lane.b32.xlu0 %v1063, 64
  %v1068 = vpop.permute.xlu0 %1067
  %1069 = vrot.lane.b32.xlu0 %v1064, 64
  %v1070 = vpop.permute.xlu0 %1069
  %v1073 = vmul.f32 %v1036, %v1068
  %v1074 = vmul.f32 %v1038, %v1070
  %v1075 = vpack.c.bf16 %v1074, %v1073
  %1077 = vrot.lane.b32.xlu0 %v1075, 32
  %v1078 = vpop.permute.xlu0 %1077
  %1080 = vst.msk [vmem:[#allocation2 + $0x38] sm:$0xff] %vm96, %v1078
  %1083 = vrot.lane.b32.xlu0 %v1073, 32
  %v1084 = vpop.permute.xlu0 %1083
  %1085 = vrot.lane.b32.xlu0 %v1074, 32
  %v1086 = vpop.permute.xlu0 %1085
  %1089 = vst.msk [vmem:[%s6] sm:$0xff] %vm96, %v1084
  %1090 = vst.msk [vmem:[%s6 + $0x8] sm:$0xff] %vm96, %v1086
  %1093 = vrot.lane.b32.xlu0 %v1061, 96
  %v1094 = vpop.permute.xlu0 %1093
  %1095 = vrot.lane.b32.xlu0 %v1062, 96
  %v1096 = vpop.permute.xlu0 %1095
  %1099 = vst.msk [vmem:[%s7] sm:$0xff] %vm96, %v1094
  %1100 = vst.msk [vmem:[%s7 + $0x8] sm:$0xff] %vm96, %v1096
  %v1101 = vld [vmem:[#allocation2] sm:$0xff]
  %v1102 = vld [vmem:[#allocation2 + $0x8] sm:$0xff]
  %v1103 = vld [vmem:[#allocation2 + $0x10] sm:$0xff]
  %v1104 = vld [vmem:[#allocation2 + $0x18] sm:$0xff]
  %v1105 = vld [vmem:[#allocation2 + $0x20] sm:$0xff]
  %v1106 = vld [vmem:[#allocation2 + $0x28] sm:$0xff]
  %v1107 = vld [vmem:[#allocation2 + $0x30] sm:$0xff]
  %v1108 = vld [vmem:[#allocation2 + $0x38] sm:$0xff]
  %v1109 = vld [vmem:[%s2] sm:$0xf]
  %v1110 = vld [vmem:[%s2 + $0x4] sm:$0xf]
  %v1111 = vld [vmem:[%s2 + $0x8] sm:$0xf]
  %v1112 = vld [vmem:[%s2 + $0xc] sm:$0xf]
  %v1117 = vunpack.c.l.b16 %v1109
  %v1118 = vunpack.c.l.b16 %v1110
  %v1119 = vunpack.c.l.b16 %v1111
  %v1120 = vunpack.c.l.b16 %v1112
  %v1121 = vpack.c.b16 %v1118, %v1117
  %v1122 = vpack.c.b16 %v1120, %v1119
  %v1126 = vsel %vm96, %v1101, 0
  %v1129 = vsel %vm96, %v1102, 0
  %v1132 = vsel %vm96, %v1103, 0
  %v1135 = vsel %vm96, %v1104, 0
  %v1138 = vsel %vm96, %v1105, 0
  %v1141 = vsel %vm96, %v1106, 0
  %v1144 = vsel %vm96, %v1107, 0
  %v1147 = vsel %vm96, %v1108, 0
  %1149 = vmatprep.subr.bf16.mxu0 0
  %1150 = vmatpush1.bf16.msra.mxu0 %v1121
  %1151 = vmatprep.subr.bf16.mxu0 0
  %1152 = vmatpush1.bf16.msra.mxu0 %v1122
  %1153 = vmatprep.subr.bf16.mxu0 0
  %1154 = vmatpush1.bf16.msra.mxu0 0
  %1155 = vmatprep.subr.bf16.mxu0 0
  %1156 = vmatpush1.bf16.msra.mxu0 0
  %1157 = vmatprep.subr.bf16.mxu0 0
  %1158 = vmatpush1.bf16.msra.mxu0 0
  %1159 = vmatprep.subr.bf16.mxu0 0
  %1160 = vmatpush1.bf16.msra.mxu0 0
  %1161 = vmatprep.subr.bf16.mxu0 0
  %1162 = vmatpush1.bf16.msra.mxu0 0
  %1163 = vmatprep.subr.bf16.mxu0 0
  %1164 = vmatpush1.bf16.msra.mxu0 0
  %1165 = vmatprep.subr.bf16.mxu0 0
  %1166 = vmatpush1.bf16.msra.mxu0 0
  %1167 = vmatprep.subr.bf16.mxu0 0
  %1168 = vmatpush1.bf16.msra.mxu0 0
  %1169 = vmatprep.subr.bf16.mxu0 0
  %1170 = vmatpush1.bf16.msra.mxu0 0
  %1171 = vmatprep.subr.bf16.mxu0 0
  %1172 = vmatpush1.bf16.msra.mxu0 0
  %1173 = vmatprep.subr.bf16.mxu0 0
  %1174 = vmatpush1.bf16.msra.mxu0 0
  %1175 = vmatprep.subr.bf16.mxu0 0
  %1176 = vmatpush1.bf16.msra.mxu0 0
  %1177 = vmatprep.subr.bf16.mxu0 0
  %1178 = vmatpush1.bf16.msra.mxu0 0
  %1179 = vmatprep.subr.bf16.mxu0 0
  %1180 = vmatpush1.bf16.msra.mxu0 0
  %1181 = vmatprep.mubr.bf16.mxu0 0
  %1182 = vmatmul.mubr.bf16.gmra.mrb[0].mxu0 %v1126
  %v1183 = vpop.f32.mrb[0].mxu0
  %v1184 = vadd.f32 0.0, %v1183
  %v1185 = vpop.f32.mrb[0].mxu0
  %v1186 = vpop.f32.mrb[0].mxu0
  %v1187 = vadd.f32 0.0, %v1186
  %v1188 = vpop.f32.mrb[0].mxu0
  %1189 = vmatprep.mubr.bf16.mxu0 0
  %1190 = vmatmul.mubr.bf16.gmra.mrb[0].mxu0 %v1129
  %v1191 = vpop.f32.mrb[0].mxu0
  %v1192 = vadd.f32 0.0, %v1191
  %v1193 = vpop.f32.mrb[0].mxu0
  %v1194 = vpop.f32.mrb[0].mxu0
  %v1195 = vadd.f32 0.0, %v1194
  %v1196 = vpop.f32.mrb[0].mxu0
  %1197 = vmatprep.mubr.bf16.mxu0 0
  %1198 = vmatmul.mubr.bf16.gmra.mrb[0].mxu0 %v1132
  %v1199 = vpop.f32.mrb[0].mxu0
  %v1200 = vadd.f32 0.0, %v1199
  %v1201 = vpop.f32.mrb[0].mxu0
  %v1202 = vpop.f32.mrb[0].mxu0
  %v1203 = vadd.f32 0.0, %v1202
  %v1204 = vpop.f32.mrb[0].mxu0
  %1205 = vmatprep.mubr.bf16.mxu0 0
  %1206 = vmatmul.mubr.bf16.gmra.mrb[0].mxu0 %v1135
  %v1207 = vpop.f32.mrb[0].mxu0
  %v1208 = vadd.f32 0.0, %v1207
  %v1209 = vpop.f32.mrb[0].mxu0
  %v1210 = vpop.f32.mrb[0].mxu0
  %v1211 = vadd.f32 0.0, %v1210
  %v1212 = vpop.f32.mrb[0].mxu0
  %1213 = vmatprep.mubr.bf16.mxu0 0
  %1214 = vmatmul.mubr.bf16.gmra.mrb[0].mxu0 %v1138
  %v1215 = vpop.f32.mrb[0].mxu0
  %v1216 = vadd.f32 0.0, %v1215
  %v1217 = vpop.f32.mrb[0].mxu0
  %v1218 = vpop.f32.mrb[0].mxu0
  %v1219 = vadd.f32 0.0, %v1218
  %v1220 = vpop.f32.mrb[0].mxu0
  %1221 = vmatprep.mubr.bf16.mxu0 0
  %1222 = vmatmul.mubr.bf16.gmra.mrb[0].mxu0 %v1141
  %v1223 = vpop.f32.mrb[0].mxu0
  %v1224 = vadd.f32 0.0, %v1223
  %v1225 = vpop.f32.mrb[0].mxu0
  %v1226 = vpop.f32.mrb[0].mxu0
  %v1227 = vadd.f32 0.0, %v1226
  %v1228 = vpop.f32.mrb[0].mxu0
  %1229 = vmatprep.mubr.bf16.mxu0 0
  %1230 = vmatmul.mubr.bf16.gmra.mrb[0].mxu0 %v1144
  %v1231 = vpop.f32.mrb[0].mxu0
  %v1232 = vadd.f32 0.0, %v1231
  %v1233 = vpop.f32.mrb[0].mxu0
  %v1234 = vpop.f32.mrb[0].mxu0
  %v1235 = vadd.f32 0.0, %v1234
  %v1236 = vpop.f32.mrb[0].mxu0
  %1237 = vmatprep.mubr.bf16.mxu0 0
  %1238 = vmatmul.mubr.bf16.gmra.mrb[0].mxu0 %v1147
  %v1239 = vpop.f32.mrb[0].mxu0
  %v1240 = vadd.f32 0.0, %v1239
  %v1241 = vpop.f32.mrb[0].mxu0
  %v1242 = vpop.f32.mrb[0].mxu0
  %v1243 = vadd.f32 0.0, %v1242
  %v1244 = vpop.f32.mrb[0].mxu0
  %1245 = vdwg.mxu0
  %v1246 = vpack.c.bf16 %v1187, %v1184
  %v1247 = vpack.c.bf16 %v1195, %v1192
  %v1248 = vpack.c.bf16 %v1203, %v1200
  %v1249 = vpack.c.bf16 %v1211, %v1208
  %v1250 = vpack.c.bf16 %v1219, %v1216
  %v1251 = vpack.c.bf16 %v1227, %v1224
  %v1252 = vpack.c.bf16 %v1235, %v1232
  %v1253 = vpack.c.bf16 %v1243, %v1240
  %1254 = vst [vmem:[#allocation3] sm:$0xff] %v1246
  %1255 = vst [vmem:[#allocation3 + $0x8] sm:$0xff] %v1247
  %1256 = vst [vmem:[#allocation3 + $0x10] sm:$0xff] %v1248
  %1257 = vst [vmem:[#allocation3 + $0x18] sm:$0xff] %v1249
  %1258 = vst [vmem:[#allocation3 + $0x20] sm:$0xff] %v1250
  %1259 = vst [vmem:[#allocation3 + $0x28] sm:$0xff] %v1251
  %1260 = vst [vmem:[#allocation3 + $0x30] sm:$0xff] %v1252
  %1261 = vst [vmem:[#allocation3 + $0x38] sm:$0xff] %v1253
  %s1262 = scalar_lea.vmem %s3, 16
  %v1263 = vld [vmem:[%s1262] sm:$0xf]
  %v1264 = vld [vmem:[%s1262 + $0x4] sm:$0xf]
  %v1265 = vld [vmem:[%s1262 + $0x8] sm:$0xf]
  %v1266 = vld [vmem:[%s1262 + $0xc] sm:$0xf]
  %s1267 = scalar_lea.vmem %s4, 1
  %v1268 = vld [vmem:[%s1267] sm:$0x1]
  %v1269 = vld [vmem:[#allocation3] sm:$0xff]
  %v1270 = vunpack.c.l.bf16 %v1269
  %v1271 = vunpack.c.h.bf16 %v1269
  %v1276 = vunpack.c.l.b16 %v1263
  %v1277 = vunpack.c.l.b16 %v1264
  %v1278 = vunpack.c.l.b16 %v1265
  %v1279 = vunpack.c.l.b16 %v1266
  %v1280 = vpack.c.b16 %v1277, %v1276
  %v1281 = vpack.c.b16 %v1279, %v1278
  %1284 = vmatprep.subr.bf16.mxu0 0
  %1285 = vmatpush1.bf16.msra.mxu0 %v1280
  %1286 = vmatprep.subr.bf16.mxu0 0
  %1287 = vmatpush1.bf16.msra.mxu0 %v1281
  %1288 = vmatprep.subr.bf16.mxu0 0
  %1289 = vmatpush1.bf16.msra.mxu0 0
  %1290 = vmatprep.subr.bf16.mxu0 0
  %1291 = vmatpush1.bf16.msra.mxu0 0
  %1292 = vmatprep.subr.bf16.mxu0 0
  %1293 = vmatpush1.bf16.msra.mxu0 0
  %1294 = vmatprep.subr.bf16.mxu0 0
  %1295 = vmatpush1.bf16.msra.mxu0 0
  %1296 = vmatprep.subr.bf16.mxu0 0
  %1297 = vmatpush1.bf16.msra.mxu0 0
  %1298 = vmatprep.subr.bf16.mxu0 0
  %1299 = vmatpush1.bf16.msra.mxu0 0
  %1300 = vmatprep.subr.bf16.mxu0 0
  %1301 = vmatpush1.bf16.msra.mxu0 0
  %1302 = vmatprep.subr.bf16.mxu0 0
  %1303 = vmatpush1.bf16.msra.mxu0 0
  %1304 = vmatprep.subr.bf16.mxu0 0
  %1305 = vmatpush1.bf16.msra.mxu0 0
  %1306 = vmatprep.subr.bf16.mxu0 0
  %1307 = vmatpush1.bf16.msra.mxu0 0
  %1308 = vmatprep.subr.bf16.mxu0 0
  %1309 = vmatpush1.bf16.msra.mxu0 0
  %1310 = vmatprep.subr.bf16.mxu0 0
  %1311 = vmatpush1.bf16.msra.mxu0 0
  %1312 = vmatprep.subr.bf16.mxu0 0
  %1313 = vmatpush1.bf16.msra.mxu0 0
  %1314 = vmatprep.subr.bf16.mxu0 0
  %1315 = vmatpush1.bf16.msra.mxu0 0
  %1316 = vmatprep.mubr.bf16.mxu0 0
  %1317 = vmatmul.mubr.bf16.gmra.mrb[0].mxu0 %v255
  %v1318 = vpop.f32.mrb[0].mxu0
  %v1319 = vadd.f32 %v1270, %v1318
  %v1320 = vpop.f32.mrb[0].mxu0
  %v1321 = vpop.f32.mrb[0].mxu0
  %v1322 = vadd.f32 %v1271, %v1321
  %v1323 = vpop.f32.mrb[0].mxu0
  %1324 = vdwg.mxu0
  %v1326 = vlaneseq
  %v1327 = vshrl.u32 %v1326, 7
  %v1328 = vsub.s32 0, %v1327
  %v1329 = vrot.slane %v1268, %v1328
  %v1331 = vadd.f32 %v1319, %v1329
  %v1332 = vadd.f32 %v1322, %v1329
  %v1333 = vxor.u32 %v1331, 2147483648
  %v1334 = vxor.u32 %v1332, 2147483648
  %v1335 = vmul.f32 %v1333, 1.442695
  %v1336 = vpow.pop %v1335
  %v1337 = vmul.f32 %v1334, 1.442695
  %v1338 = vpow.pop %v1337
  %v1339 = vadd.f32 %v1336, 1.0
  %v1340 = vadd.f32 %v1338, 1.0
  %v1341 = vrcp.pop %v1339
  %v1342 = vmul.f32 1.0, %v1341
  %v1343 = vrcp.pop %v1340
  %v1344 = vmul.f32 1.0, %v1343
  %v1345 = vtanh.pop %v1331
  %v1346 = vtanh.pop %v1332
  %v1347 = vmul.f32 %v1342, 0.0
  %v1348 = vmul.f32 %v1344, 0.0
  %1351 = vrot.lane.b32.xlu0 %v1345, 64
  %v1352 = vpop.permute.xlu0 %1351
  %1353 = vrot.lane.b32.xlu0 %v1346, 64
  %v1354 = vpop.permute.xlu0 %1353
  %v1357 = vmul.f32 %v1342, %v1352
  %v1358 = vmul.f32 %v1344, %v1354
  %1361 = vrot.lane.b32.xlu0 %v1357, 32
  %v1362 = vpop.permute.xlu0 %1361
  %1363 = vrot.lane.b32.xlu0 %v1358, 32
  %v1364 = vpop.permute.xlu0 %1363
  %v1367 = vadd.f32 %v1347, %v1362
  %v1368 = vadd.f32 %v1348, %v1364
  %v1369 = vtanh.pop %v1367
  %v1370 = vtanh.pop %v1368
  %1373 = vrot.lane.b32.xlu0 %v1369, 64
  %v1374 = vpop.permute.xlu0 %1373
  %1375 = vrot.lane.b32.xlu0 %v1370, 64
  %v1376 = vpop.permute.xlu0 %1375
  %v1379 = vmul.f32 %v1342, %v1374
  %v1380 = vmul.f32 %v1344, %v1376
  %1383 = vrot.lane.b32.xlu0 %v1379, 32
  %v1384 = vpop.permute.xlu0 %1383
  %1385 = vrot.lane.b32.xlu0 %v1380, 32
  %v1386 = vpop.permute.xlu0 %1385
  %1389 = vst.msk [vmem:[%s5] sm:$0xff] %vm96, %v1384
  %1390 = vst.msk [vmem:[%s5 + $0x8] sm:$0xff] %vm96, %v1386
  %v1391 = vpack.c.bf16 %v1380, %v1379
  %v1392 = vld [vmem:[#allocation3 + $0x8] sm:$0xff]
  %v1393 = vunpack.c.l.bf16 %v1392
  %v1394 = vunpack.c.h.bf16 %v1392
  %1396 = vrot.lane.b32.xlu0 %v1391, 32
  %v1397 = vpop.permute.xlu0 %1396
  %v1399 = vsel %vm96, %v1397, 0
  %1401 = vmatprep.subr.bf16.mxu0 0
  %1402 = vmatpush1.bf16.msra.mxu0 %v1280
  %1403 = vmatprep.subr.bf16.mxu0 0
  %1404 = vmatpush1.bf16.msra.mxu0 %v1281
  %1405 = vmatprep.subr.bf16.mxu0 0
  %1406 = vmatpush1.bf16.msra.mxu0 0
  %1407 = vmatprep.subr.bf16.mxu0 0
  %1408 = vmatpush1.bf16.msra.mxu0 0
  %1409 = vmatprep.subr.bf16.mxu0 0
  %1410 = vmatpush1.bf16.msra.mxu0 0
  %1411 = vmatprep.subr.bf16.mxu0 0
  %1412 = vmatpush1.bf16.msra.mxu0 0
  %1413 = vmatprep.subr.bf16.mxu0 0
  %1414 = vmatpush1.bf16.msra.mxu0 0
  %1415 = vmatprep.subr.bf16.mxu0 0
  %1416 = vmatpush1.bf16.msra.mxu0 0
  %1417 = vmatprep.subr.bf16.mxu0 0
  %1418 = vmatpush1.bf16.msra.mxu0 0
  %1419 = vmatprep.subr.bf16.mxu0 0
  %1420 = vmatpush1.bf16.msra.mxu0 0
  %1421 = vmatprep.subr.bf16.mxu0 0
  %1422 = vmatpush1.bf16.msra.mxu0 0
  %1423 = vmatprep.subr.bf16.mxu0 0
  %1424 = vmatpush1.bf16.msra.mxu0 0
  %1425 = vmatprep.subr.bf16.mxu0 0
  %1426 = vmatpush1.bf16.msra.mxu0 0
  %1427 = vmatprep.subr.bf16.mxu0 0
  %1428 = vmatpush1.bf16.msra.mxu0 0
  %1429 = vmatprep.subr.bf16.mxu0 0
  %1430 = vmatpush1.bf16.msra.mxu0 0
  %1431 = vmatprep.subr.bf16.mxu0 0
  %1432 = vmatpush1.bf16.msra.mxu0 0
  %1433 = vmatprep.mubr.bf16.mxu0 0
  %1434 = vmatmul.mubr.bf16.gmra.mrb[0].mxu0 %v1399
  %v1435 = vpop.f32.mrb[0].mxu0
  %v1436 = vadd.f32 %v1393, %v1435
  %v1437 = vpop.f32.mrb[0].mxu0
  %v1438 = vpop.f32.mrb[0].mxu0
  %v1439 = vadd.f32 %v1394, %v1438
  %v1440 = vpop.f32.mrb[0].mxu0
  %1441 = vdwg.mxu0
  %v1442 = vadd.f32 %v1436, %v1329
  %v1443 = vadd.f32 %v1439, %v1329
  %v1444 = vxor.u32 %v1442, 2147483648
  %v1445 = vxor.u32 %v1443, 2147483648
  %v1446 = vmul.f32 %v1444, 1.442695
  %v1447 = vpow.pop %v1446
  %v1448 = vmul.f32 %v1445, 1.442695
  %v1449 = vpow.pop %v1448
  %v1450 = vadd.f32 %v1447, 1.0
  %v1451 = vadd.f32 %v1449, 1.0
  %v1452 = vrcp.pop %v1450
  %v1453 = vmul.f32 1.0, %v1452
  %v1454 = vrcp.pop %v1451
  %v1455 = vmul.f32 1.0, %v1454
  %v1456 = vtanh.pop %v1442
  %v1457 = vtanh.pop %v1443
  %v1458 = vmul.f32 %v1453, %v1367
  %v1459 = vmul.f32 %v1455, %v1368
  %1462 = vrot.lane.b32.xlu0 %v1456, 64
  %v1463 = vpop.permute.xlu0 %1462
  %1464 = vrot.lane.b32.xlu0 %v1457, 64
  %v1465 = vpop.permute.xlu0 %1464
  %v1468 = vmul.f32 %v1453, %v1463
  %v1469 = vmul.f32 %v1455, %v1465
  %1472 = vrot.lane.b32.xlu0 %v1468, 32
  %v1473 = vpop.permute.xlu0 %1472
  %1474 = vrot.lane.b32.xlu0 %v1469, 32
  %v1475 = vpop.permute.xlu0 %1474
  %v1478 = vadd.f32 %v1458, %v1473
  %v1479 = vadd.f32 %v1459, %v1475
  %v1480 = vtanh.pop %v1478
  %v1481 = vtanh.pop %v1479
  %1484 = vrot.lane.b32.xlu0 %v1480, 64
  %v1485 = vpop.permute.xlu0 %1484
  %1486 = vrot.lane.b32.xlu0 %v1481, 64
  %v1487 = vpop.permute.xlu0 %1486
  %v1490 = vmul.f32 %v1453, %v1485
  %v1491 = vmul.f32 %v1455, %v1487
  %1494 = vrot.lane.b32.xlu0 %v1490, 32
  %v1495 = vpop.permute.xlu0 %1494
  %1496 = vrot.lane.b32.xlu0 %v1491, 32
  %v1497 = vpop.permute.xlu0 %1496
  %1500 = vst.msk [vmem:[%s5 + $0x10] sm:$0xff] %vm96, %v1495
  %1501 = vst.msk [vmem:[%s5 + $0x18] sm:$0xff] %vm96, %v1497
  %v1502 = vpack.c.bf16 %v1491, %v1490
  %v1503 = vld [vmem:[#allocation3 + $0x10] sm:$0xff]
  %v1504 = vunpack.c.l.bf16 %v1503
  %v1505 = vunpack.c.h.bf16 %v1503
  %1507 = vrot.lane.b32.xlu0 %v1502, 32
  %v1508 = vpop.permute.xlu0 %1507
  %v1510 = vsel %vm96, %v1508, 0
  %1512 = vmatprep.subr.bf16.mxu0 0
  %1513 = vmatpush1.bf16.msra.mxu0 %v1280
  %1514 = vmatprep.subr.bf16.mxu0 0
  %1515 = vmatpush1.bf16.msra.mxu0 %v1281
  %1516 = vmatprep.subr.bf16.mxu0 0
  %1517 = vmatpush1.bf16.msra.mxu0 0
  %1518 = vmatprep.subr.bf16.mxu0 0
  %1519 = vmatpush1.bf16.msra.mxu0 0
  %1520 = vmatprep.subr.bf16.mxu0 0
  %1521 = vmatpush1.bf16.msra.mxu0 0
  %1522 = vmatprep.subr.bf16.mxu0 0
  %1523 = vmatpush1.bf16.msra.mxu0 0
  %1524 = vmatprep.subr.bf16.mxu0 0
  %1525 = vmatpush1.bf16.msra.mxu0 0
  %1526 = vmatprep.subr.bf16.mxu0 0
  %1527 = vmatpush1.bf16.msra.mxu0 0
  %1528 = vmatprep.subr.bf16.mxu0 0
  %1529 = vmatpush1.bf16.msra.mxu0 0
  %1530 = vmatprep.subr.bf16.mxu0 0
  %1531 = vmatpush1.bf16.msra.mxu0 0
  %1532 = vmatprep.subr.bf16.mxu0 0
  %1533 = vmatpush1.bf16.msra.mxu0 0
  %1534 = vmatprep.subr.bf16.mxu0 0
  %1535 = vmatpush1.bf16.msra.mxu0 0
  %1536 = vmatprep.subr.bf16.mxu0 0
  %1537 = vmatpush1.bf16.msra.mxu0 0
  %1538 = vmatprep.subr.bf16.mxu0 0
  %1539 = vmatpush1.bf16.msra.mxu0 0
  %1540 = vmatprep.subr.bf16.mxu0 0
  %1541 = vmatpush1.bf16.msra.mxu0 0
  %1542 = vmatprep.subr.bf16.mxu0 0
  %1543 = vmatpush1.bf16.msra.mxu0 0
  %1544 = vmatprep.mubr.bf16.mxu0 0
  %1545 = vmatmul.mubr.bf16.gmra.mrb[0].mxu0 %v1510
  %v1546 = vpop.f32.mrb[0].mxu0
  %v1547 = vadd.f32 %v1504, %v1546
  %v1548 = vpop.f32.mrb[0].mxu0
  %v1549 = vpop.f32.mrb[0].mxu0
  %v1550 = vadd.f32 %v1505, %v1549
  %v1551 = vpop.f32.mrb[0].mxu0
  %1552 = vdwg.mxu0
  %v1553 = vadd.f32 %v1547, %v1329
  %v1554 = vadd.f32 %v1550, %v1329
  %v1555 = vxor.u32 %v1553, 2147483648
  %v1556 = vxor.u32 %v1554, 2147483648
  %v1557 = vmul.f32 %v1555, 1.442695
  %v1558 = vpow.pop %v1557
  %v1559 = vmul.f32 %v1556, 1.442695
  %v1560 = vpow.pop %v1559
  %v1561 = vadd.f32 %v1558, 1.0
  %v1562 = vadd.f32 %v1560, 1.0
  %v1563 = vrcp.pop %v1561
  %v1564 = vmul.f32 1.0, %v1563
  %v1565 = vrcp.pop %v1562
  %v1566 = vmul.f32 1.0, %v1565
  %v1567 = vtanh.pop %v1553
  %v1568 = vtanh.pop %v1554
  %v1569 = vmul.f32 %v1564, %v1478
  %v1570 = vmul.f32 %v1566, %v1479
  %1573 = vrot.lane.b32.xlu0 %v1567, 64
  %v1574 = vpop.permute.xlu0 %1573
  %1575 = vrot.lane.b32.xlu0 %v1568, 64
  %v1576 = vpop.permute.xlu0 %1575
  %v1579 = vmul.f32 %v1564, %v1574
  %v1580 = vmul.f32 %v1566, %v1576
  %1583 = vrot.lane.b32.xlu0 %v1579, 32
  %v1584 = vpop.permute.xlu0 %1583
  %1585 = vrot.lane.b32.xlu0 %v1580, 32
  %v1586 = vpop.permute.xlu0 %1585
  %v1589 = vadd.f32 %v1569, %v1584
  %v1590 = vadd.f32 %v1570, %v1586
  %v1591 = vtanh.pop %v1589
  %v1592 = vtanh.pop %v1590
  %1595 = vrot.lane.b32.xlu0 %v1591, 64
  %v1596 = vpop.permute.xlu0 %1595
  %1597 = vrot.lane.b32.xlu0 %v1592, 64
  %v1598 = vpop.permute.xlu0 %1597
  %v1601 = vmul.f32 %v1564, %v1596
  %v1602 = vmul.f32 %v1566, %v1598
  %1605 = vrot.lane.b32.xlu0 %v1601, 32
  %v1606 = vpop.permute.xlu0 %1605
  %1607 = vrot.lane.b32.xlu0 %v1602, 32
  %v1608 = vpop.permute.xlu0 %1607
  %1611 = vst.msk [vmem:[%s5 + $0x20] sm:$0xff] %vm96, %v1606
  %1612 = vst.msk [vmem:[%s5 + $0x28] sm:$0xff] %vm96, %v1608
  %v1613 = vpack.c.bf16 %v1602, %v1601
  %v1614 = vld [vmem:[#allocation3 + $0x18] sm:$0xff]
  %v1615 = vunpack.c.l.bf16 %v1614
  %v1616 = vunpack.c.h.bf16 %v1614
  %1618 = vrot.lane.b32.xlu0 %v1613, 32
  %v1619 = vpop.permute.xlu0 %1618
  %v1621 = vsel %vm96, %v1619, 0
  %1623 = vmatprep.subr.bf16.mxu0 0
  %1624 = vmatpush1.bf16.msra.mxu0 %v1280
  %1625 = vmatprep.subr.bf16.mxu0 0
  %1626 = vmatpush1.bf16.msra.mxu0 %v1281
  %1627 = vmatprep.subr.bf16.mxu0 0
  %1628 = vmatpush1.bf16.msra.mxu0 0
  %1629 = vmatprep.subr.bf16.mxu0 0
  %1630 = vmatpush1.bf16.msra.mxu0 0
  %1631 = vmatprep.subr.bf16.mxu0 0
  %1632 = vmatpush1.bf16.msra.mxu0 0
  %1633 = vmatprep.subr.bf16.mxu0 0
  %1634 = vmatpush1.bf16.msra.mxu0 0
  %1635 = vmatprep.subr.bf16.mxu0 0
  %1636 = vmatpush1.bf16.msra.mxu0 0
  %1637 = vmatprep.subr.bf16.mxu0 0
  %1638 = vmatpush1.bf16.msra.mxu0 0
  %1639 = vmatprep.subr.bf16.mxu0 0
  %1640 = vmatpush1.bf16.msra.mxu0 0
  %1641 = vmatprep.subr.bf16.mxu0 0
  %1642 = vmatpush1.bf16.msra.mxu0 0
  %1643 = vmatprep.subr.bf16.mxu0 0
  %1644 = vmatpush1.bf16.msra.mxu0 0
  %1645 = vmatprep.subr.bf16.mxu0 0
  %1646 = vmatpush1.bf16.msra.mxu0 0
  %1647 = vmatprep.subr.bf16.mxu0 0
  %1648 = vmatpush1.bf16.msra.mxu0 0
  %1649 = vmatprep.subr.bf16.mxu0 0
  %1650 = vmatpush1.bf16.msra.mxu0 0
  %1651 = vmatprep.subr.bf16.mxu0 0
  %1652 = vmatpush1.bf16.msra.mxu0 0
  %1653 = vmatprep.subr.bf16.mxu0 0
  %1654 = vmatpush1.bf16.msra.mxu0 0
  %1655 = vmatprep.mubr.bf16.mxu0 0
  %1656 = vmatmul.mubr.bf16.gmra.mrb[0].mxu0 %v1621
  %v1657 = vpop.f32.mrb[0].mxu0
  %v1658 = vadd.f32 %v1615, %v1657
  %v1659 = vpop.f32.mrb[0].mxu0
  %v1660 = vpop.f32.mrb[0].mxu0
  %v1661 = vadd.f32 %v1616, %v1660
  %v1662 = vpop.f32.mrb[0].mxu0
  %1663 = vdwg.mxu0
  %v1664 = vadd.f32 %v1658, %v1329
  %v1665 = vadd.f32 %v1661, %v1329
  %v1666 = vxor.u32 %v1664, 2147483648
  %v1667 = vxor.u32 %v1665, 2147483648
  %v1668 = vmul.f32 %v1666, 1.442695
  %v1669 = vpow.pop %v1668
  %v1670 = vmul.f32 %v1667, 1.442695
  %v1671 = vpow.pop %v1670
  %v1672 = vadd.f32 %v1669, 1.0
  %v1673 = vadd.f32 %v1671, 1.0
  %v1674 = vrcp.pop %v1672
  %v1675 = vmul.f32 1.0, %v1674
  %v1676 = vrcp.pop %v1673
  %v1677 = vmul.f32 1.0, %v1676
  %v1678 = vtanh.pop %v1664
  %v1679 = vtanh.pop %v1665
  %v1680 = vmul.f32 %v1675, %v1589
  %v1681 = vmul.f32 %v1677, %v1590
  %1684 = vrot.lane.b32.xlu0 %v1678, 64
  %v1685 = vpop.permute.xlu0 %1684
  %1686 = vrot.lane.b32.xlu0 %v1679, 64
  %v1687 = vpop.permute.xlu0 %1686
  %v1690 = vmul.f32 %v1675, %v1685
  %v1691 = vmul.f32 %v1677, %v1687
  %1694 = vrot.lane.b32.xlu0 %v1690, 32
  %v1695 = vpop.permute.xlu0 %1694
  %1696 = vrot.lane.b32.xlu0 %v1691, 32
  %v1697 = vpop.permute.xlu0 %1696
  %v1700 = vadd.f32 %v1680, %v1695
  %v1701 = vadd.f32 %v1681, %v1697
  %v1702 = vtanh.pop %v1700
  %v1703 = vtanh.pop %v1701
  %1706 = vrot.lane.b32.xlu0 %v1702, 64
  %v1707 = vpop.permute.xlu0 %1706
  %1708 = vrot.lane.b32.xlu0 %v1703, 64
  %v1709 = vpop.permute.xlu0 %1708
  %v1712 = vmul.f32 %v1675, %v1707
  %v1713 = vmul.f32 %v1677, %v1709
  %1716 = vrot.lane.b32.xlu0 %v1712, 32
  %v1717 = vpop.permute.xlu0 %1716
  %1718 = vrot.lane.b32.xlu0 %v1713, 32
  %v1719 = vpop.permute.xlu0 %1718
  %1722 = vst.msk [vmem:[%s5 + $0x30] sm:$0xff] %vm96, %v1717
  %1723 = vst.msk [vmem:[%s5 + $0x38] sm:$0xff] %vm96, %v1719
  %v1724 = vpack.c.bf16 %v1713, %v1712
  %v1725 = vld [vmem:[#allocation3 + $0x20] sm:$0xff]
  %v1726 = vunpack.c.l.bf16 %v1725
  %v1727 = vunpack.c.h.bf16 %v1725
  %1729 = vrot.lane.b32.xlu0 %v1724, 32
  %v1730 = vpop.permute.xlu0 %1729
  %v1732 = vsel %vm96, %v1730, 0
  %1734 = vmatprep.subr.bf16.mxu0 0
  %1735 = vmatpush1.bf16.msra.mxu0 %v1280
  %1736 = vmatprep.subr.bf16.mxu0 0
  %1737 = vmatpush1.bf16.msra.mxu0 %v1281
  %1738 = vmatprep.subr.bf16.mxu0 0
  %1739 = vmatpush1.bf16.msra.mxu0 0
  %1740 = vmatprep.subr.bf16.mxu0 0
  %1741 = vmatpush1.bf16.msra.mxu0 0
  %1742 = vmatprep.subr.bf16.mxu0 0
  %1743 = vmatpush1.bf16.msra.mxu0 0
  %1744 = vmatprep.subr.bf16.mxu0 0
  %1745 = vmatpush1.bf16.msra.mxu0 0
  %1746 = vmatprep.subr.bf16.mxu0 0
  %1747 = vmatpush1.bf16.msra.mxu0 0
  %1748 = vmatprep.subr.bf16.mxu0 0
  %1749 = vmatpush1.bf16.msra.mxu0 0
  %1750 = vmatprep.subr.bf16.mxu0 0
  %1751 = vmatpush1.bf16.msra.mxu0 0
  %1752 = vmatprep.subr.bf16.mxu0 0
  %1753 = vmatpush1.bf16.msra.mxu0 0
  %1754 = vmatprep.subr.bf16.mxu0 0
  %1755 = vmatpush1.bf16.msra.mxu0 0
  %1756 = vmatprep.subr.bf16.mxu0 0
  %1757 = vmatpush1.bf16.msra.mxu0 0
  %1758 = vmatprep.subr.bf16.mxu0 0
  %1759 = vmatpush1.bf16.msra.mxu0 0
  %1760 = vmatprep.subr.bf16.mxu0 0
  %1761 = vmatpush1.bf16.msra.mxu0 0
  %1762 = vmatprep.subr.bf16.mxu0 0
  %1763 = vmatpush1.bf16.msra.mxu0 0
  %1764 = vmatprep.subr.bf16.mxu0 0
  %1765 = vmatpush1.bf16.msra.mxu0 0
  %1766 = vmatprep.mubr.bf16.mxu0 0
  %1767 = vmatmul.mubr.bf16.gmra.mrb[0].mxu0 %v1732
  %v1768 = vpop.f32.mrb[0].mxu0
  %v1769 = vadd.f32 %v1726, %v1768
  %v1770 = vpop.f32.mrb[0].mxu0
  %v1771 = vpop.f32.mrb[0].mxu0
  %v1772 = vadd.f32 %v1727, %v1771
  %v1773 = vpop.f32.mrb[0].mxu0
  %1774 = vdwg.mxu0
  %v1775 = vadd.f32 %v1769, %v1329
  %v1776 = vadd.f32 %v1772, %v1329
  %v1777 = vxor.u32 %v1775, 2147483648
  %v1778 = vxor.u32 %v1776, 2147483648
  %v1779 = vmul.f32 %v1777, 1.442695
  %v1780 = vpow.pop %v1779
  %v1781 = vmul.f32 %v1778, 1.442695
  %v1782 = vpow.pop %v1781
  %v1783 = vadd.f32 %v1780, 1.0
  %v1784 = vadd.f32 %v1782, 1.0
  %v1785 = vrcp.pop %v1783
  %v1786 = vmul.f32 1.0, %v1785
  %v1787 = vrcp.pop %v1784
  %v1788 = vmul.f32 1.0, %v1787
  %v1789 = vtanh.pop %v1775
  %v1790 = vtanh.pop %v1776
  %v1791 = vmul.f32 %v1786, %v1700
  %v1792 = vmul.f32 %v1788, %v1701
  %1795 = vrot.lane.b32.xlu0 %v1789, 64
  %v1796 = vpop.permute.xlu0 %1795
  %1797 = vrot.lane.b32.xlu0 %v1790, 64
  %v1798 = vpop.permute.xlu0 %1797
  %v1801 = vmul.f32 %v1786, %v1796
  %v1802 = vmul.f32 %v1788, %v1798
  %1805 = vrot.lane.b32.xlu0 %v1801, 32
  %v1806 = vpop.permute.xlu0 %1805
  %1807 = vrot.lane.b32.xlu0 %v1802, 32
  %v1808 = vpop.permute.xlu0 %1807
  %v1811 = vadd.f32 %v1791, %v1806
  %v1812 = vadd.f32 %v1792, %v1808
  %v1813 = vtanh.pop %v1811
  %v1814 = vtanh.pop %v1812
  %1817 = vrot.lane.b32.xlu0 %v1813, 64
  %v1818 = vpop.permute.xlu0 %1817
  %1819 = vrot.lane.b32.xlu0 %v1814, 64
  %v1820 = vpop.permute.xlu0 %1819
  %v1823 = vmul.f32 %v1786, %v1818
  %v1824 = vmul.f32 %v1788, %v1820
  %1827 = vrot.lane.b32.xlu0 %v1823, 32
  %v1828 = vpop.permute.xlu0 %1827
  %1829 = vrot.lane.b32.xlu0 %v1824, 32
  %v1830 = vpop.permute.xlu0 %1829
  %1833 = vst.msk [vmem:[%s5 + $0x40] sm:$0xff] %vm96, %v1828
  %1834 = vst.msk [vmem:[%s5 + $0x48] sm:$0xff] %vm96, %v1830
  %v1835 = vpack.c.bf16 %v1824, %v1823
  %v1836 = vld [vmem:[#allocation3 + $0x28] sm:$0xff]
  %v1837 = vunpack.c.l.bf16 %v1836
  %v1838 = vunpack.c.h.bf16 %v1836
  %1840 = vrot.lane.b32.xlu0 %v1835, 32
  %v1841 = vpop.permute.xlu0 %1840
  %v1843 = vsel %vm96, %v1841, 0
  %1845 = vmatprep.subr.bf16.mxu0 0
  %1846 = vmatpush1.bf16.msra.mxu0 %v1280
  %1847 = vmatprep.subr.bf16.mxu0 0
  %1848 = vmatpush1.bf16.msra.mxu0 %v1281
  %1849 = vmatprep.subr.bf16.mxu0 0
  %1850 = vmatpush1.bf16.msra.mxu0 0
  %1851 = vmatprep.subr.bf16.mxu0 0
  %1852 = vmatpush1.bf16.msra.mxu0 0
  %1853 = vmatprep.subr.bf16.mxu0 0
  %1854 = vmatpush1.bf16.msra.mxu0 0
  %1855 = vmatprep.subr.bf16.mxu0 0
  %1856 = vmatpush1.bf16.msra.mxu0 0
  %1857 = vmatprep.subr.bf16.mxu0 0
  %1858 = vmatpush1.bf16.msra.mxu0 0
  %1859 = vmatprep.subr.bf16.mxu0 0
  %1860 = vmatpush1.bf16.msra.mxu0 0
  %1861 = vmatprep.subr.bf16.mxu0 0
  %1862 = vmatpush1.bf16.msra.mxu0 0
  %1863 = vmatprep.subr.bf16.mxu0 0
  %1864 = vmatpush1.bf16.msra.mxu0 0
  %1865 = vmatprep.subr.bf16.mxu0 0
  %1866 = vmatpush1.bf16.msra.mxu0 0
  %1867 = vmatprep.subr.bf16.mxu0 0
  %1868 = vmatpush1.bf16.msra.mxu0 0
  %1869 = vmatprep.subr.bf16.mxu0 0
  %1870 = vmatpush1.bf16.msra.mxu0 0
  %1871 = vmatprep.subr.bf16.mxu0 0
  %1872 = vmatpush1.bf16.msra.mxu0 0
  %1873 = vmatprep.subr.bf16.mxu0 0
  %1874 = vmatpush1.bf16.msra.mxu0 0
  %1875 = vmatprep.subr.bf16.mxu0 0
  %1876 = vmatpush1.bf16.msra.mxu0 0
  %1877 = vmatprep.mubr.bf16.mxu0 0
  %1878 = vmatmul.mubr.bf16.gmra.mrb[0].mxu0 %v1843
  %v1879 = vpop.f32.mrb[0].mxu0
  %v1880 = vadd.f32 %v1837, %v1879
  %v1881 = vpop.f32.mrb[0].mxu0
  %v1882 = vpop.f32.mrb[0].mxu0
  %v1883 = vadd.f32 %v1838, %v1882
  %v1884 = vpop.f32.mrb[0].mxu0
  %1885 = vdwg.mxu0
  %v1886 = vadd.f32 %v1880, %v1329
  %v1887 = vadd.f32 %v1883, %v1329
  %v1888 = vxor.u32 %v1886, 2147483648
  %v1889 = vxor.u32 %v1887, 2147483648
  %v1890 = vmul.f32 %v1888, 1.442695
  %v1891 = vpow.pop %v1890
  %v1892 = vmul.f32 %v1889, 1.442695
  %v1893 = vpow.pop %v1892
  %v1894 = vadd.f32 %v1891, 1.0
  %v1895 = vadd.f32 %v1893, 1.0
  %v1896 = vrcp.pop %v1894
  %v1897 = vmul.f32 1.0, %v1896
  %v1898 = vrcp.pop %v1895
  %v1899 = vmul.f32 1.0, %v1898
  %v1900 = vtanh.pop %v1886
  %v1901 = vtanh.pop %v1887
  %v1902 = vmul.f32 %v1897, %v1811
  %v1903 = vmul.f32 %v1899, %v1812
  %1906 = vrot.lane.b32.xlu0 %v1900, 64
  %v1907 = vpop.permute.xlu0 %1906
  %1908 = vrot.lane.b32.xlu0 %v1901, 64
  %v1909 = vpop.permute.xlu0 %1908
  %v1912 = vmul.f32 %v1897, %v1907
  %v1913 = vmul.f32 %v1899, %v1909
  %1916 = vrot.lane.b32.xlu0 %v1912, 32
  %v1917 = vpop.permute.xlu0 %1916
  %1918 = vrot.lane.b32.xlu0 %v1913, 32
  %v1919 = vpop.permute.xlu0 %1918
  %v1922 = vadd.f32 %v1902, %v1917
  %v1923 = vadd.f32 %v1903, %v1919
  %v1924 = vtanh.pop %v1922
  %v1925 = vtanh.pop %v1923
  %1928 = vrot.lane.b32.xlu0 %v1924, 64
  %v1929 = vpop.permute.xlu0 %1928
  %1930 = vrot.lane.b32.xlu0 %v1925, 64
  %v1931 = vpop.permute.xlu0 %1930
  %v1934 = vmul.f32 %v1897, %v1929
  %v1935 = vmul.f32 %v1899, %v1931
  %1938 = vrot.lane.b32.xlu0 %v1934, 32
  %v1939 = vpop.permute.xlu0 %1938
  %1940 = vrot.lane.b32.xlu0 %v1935, 32
  %v1941 = vpop.permute.xlu0 %1940
  %1944 = vst.msk [vmem:[%s5 + $0x50] sm:$0xff] %vm96, %v1939
  %1945 = vst.msk [vmem:[%s5 + $0x58] sm:$0xff] %vm96, %v1941
  %v1946 = vpack.c.bf16 %v1935, %v1934
  %v1947 = vld [vmem:[#allocation3 + $0x30] sm:$0xff]
  %v1948 = vunpack.c.l.bf16 %v1947
  %v1949 = vunpack.c.h.bf16 %v1947
  %1951 = vrot.lane.b32.xlu0 %v1946, 32
  %v1952 = vpop.permute.xlu0 %1951
  %v1954 = vsel %vm96, %v1952, 0
  %1956 = vmatprep.subr.bf16.mxu0 0
  %1957 = vmatpush1.bf16.msra.mxu0 %v1280
  %1958 = vmatprep.subr.bf16.mxu0 0
  %1959 = vmatpush1.bf16.msra.mxu0 %v1281
  %1960 = vmatprep.subr.bf16.mxu0 0
  %1961 = vmatpush1.bf16.msra.mxu0 0
  %1962 = vmatprep.subr.bf16.mxu0 0
  %1963 = vmatpush1.bf16.msra.mxu0 0
  %1964 = vmatprep.subr.bf16.mxu0 0
  %1965 = vmatpush1.bf16.msra.mxu0 0
  %1966 = vmatprep.subr.bf16.mxu0 0
  %1967 = vmatpush1.bf16.msra.mxu0 0
  %1968 = vmatprep.subr.bf16.mxu0 0
  %1969 = vmatpush1.bf16.msra.mxu0 0
  %1970 = vmatprep.subr.bf16.mxu0 0
  %1971 = vmatpush1.bf16.msra.mxu0 0
  %1972 = vmatprep.subr.bf16.mxu0 0
  %1973 = vmatpush1.bf16.msra.mxu0 0
  %1974 = vmatprep.subr.bf16.mxu0 0
  %1975 = vmatpush1.bf16.msra.mxu0 0
  %1976 = vmatprep.subr.bf16.mxu0 0
  %1977 = vmatpush1.bf16.msra.mxu0 0
  %1978 = vmatprep.subr.bf16.mxu0 0
  %1979 = vmatpush1.bf16.msra.mxu0 0
  %1980 = vmatprep.subr.bf16.mxu0 0
  %1981 = vmatpush1.bf16.msra.mxu0 0
  %1982 = vmatprep.subr.bf16.mxu0 0
  %1983 = vmatpush1.bf16.msra.mxu0 0
  %1984 = vmatprep.subr.bf16.mxu0 0
  %1985 = vmatpush1.bf16.msra.mxu0 0
  %1986 = vmatprep.subr.bf16.mxu0 0
  %1987 = vmatpush1.bf16.msra.mxu0 0
  %1988 = vmatprep.mubr.bf16.mxu0 0
  %1989 = vmatmul.mubr.bf16.gmra.mrb[0].mxu0 %v1954
  %v1990 = vpop.f32.mrb[0].mxu0
  %v1991 = vadd.f32 %v1948, %v1990
  %v1992 = vpop.f32.mrb[0].mxu0
  %v1993 = vpop.f32.mrb[0].mxu0
  %v1994 = vadd.f32 %v1949, %v1993
  %v1995 = vpop.f32.mrb[0].mxu0
  %1996 = vdwg.mxu0
  %v1997 = vadd.f32 %v1991, %v1329
  %v1998 = vadd.f32 %v1994, %v1329
  %v1999 = vxor.u32 %v1997, 2147483648
  %v2000 = vxor.u32 %v1998, 2147483648
  %v2001 = vmul.f32 %v1999, 1.442695
  %v2002 = vpow.pop %v2001
  %v2003 = vmul.f32 %v2000, 1.442695
  %v2004 = vpow.pop %v2003
  %v2005 = vadd.f32 %v2002, 1.0
  %v2006 = vadd.f32 %v2004, 1.0
  %v2007 = vrcp.pop %v2005
  %v2008 = vmul.f32 1.0, %v2007
  %v2009 = vrcp.pop %v2006
  %v2010 = vmul.f32 1.0, %v2009
  %v2011 = vtanh.pop %v1997
  %v2012 = vtanh.pop %v1998
  %v2013 = vmul.f32 %v2008, %v1922
  %v2014 = vmul.f32 %v2010, %v1923
  %2017 = vrot.lane.b32.xlu0 %v2011, 64
  %v2018 = vpop.permute.xlu0 %2017
  %2019 = vrot.lane.b32.xlu0 %v2012, 64
  %v2020 = vpop.permute.xlu0 %2019
  %v2023 = vmul.f32 %v2008, %v2018
  %v2024 = vmul.f32 %v2010, %v2020
  %2027 = vrot.lane.b32.xlu0 %v2023, 32
  %v2028 = vpop.permute.xlu0 %2027
  %2029 = vrot.lane.b32.xlu0 %v2024, 32
  %v2030 = vpop.permute.xlu0 %2029
  %v2033 = vadd.f32 %v2013, %v2028
  %v2034 = vadd.f32 %v2014, %v2030
  %v2035 = vtanh.pop %v2033
  %v2036 = vtanh.pop %v2034
  %2039 = vrot.lane.b32.xlu0 %v2035, 64
  %v2040 = vpop.permute.xlu0 %2039
  %2041 = vrot.lane.b32.xlu0 %v2036, 64
  %v2042 = vpop.permute.xlu0 %2041
  %v2045 = vmul.f32 %v2008, %v2040
  %v2046 = vmul.f32 %v2010, %v2042
  %2049 = vrot.lane.b32.xlu0 %v2045, 32
  %v2050 = vpop.permute.xlu0 %2049
  %2051 = vrot.lane.b32.xlu0 %v2046, 32
  %v2052 = vpop.permute.xlu0 %2051
  %2055 = vst.msk [vmem:[%s5 + $0x60] sm:$0xff] %vm96, %v2050
  %2056 = vst.msk [vmem:[%s5 + $0x68] sm:$0xff] %vm96, %v2052
  %v2057 = vpack.c.bf16 %v2046, %v2045
  %v2058 = vld [vmem:[#allocation3 + $0x38] sm:$0xff]
  %v2059 = vunpack.c.l.bf16 %v2058
  %v2060 = vunpack.c.h.bf16 %v2058
  %2062 = vrot.lane.b32.xlu0 %v2057, 32
  %v2063 = vpop.permute.xlu0 %2062
  %v2065 = vsel %vm96, %v2063, 0
  %2067 = vmatprep.subr.bf16.mxu0 0
  %2068 = vmatpush1.bf16.msra.mxu0 %v1280
  %2069 = vmatprep.subr.bf16.mxu0 0
  %2070 = vmatpush1.bf16.msra.mxu0 %v1281
  %2071 = vmatprep.subr.bf16.mxu0 0
  %2072 = vmatpush1.bf16.msra.mxu0 0
  %2073 = vmatprep.subr.bf16.mxu0 0
  %2074 = vmatpush1.bf16.msra.mxu0 0
  %2075 = vmatprep.subr.bf16.mxu0 0
  %2076 = vmatpush1.bf16.msra.mxu0 0
  %2077 = vmatprep.subr.bf16.mxu0 0
  %2078 = vmatpush1.bf16.msra.mxu0 0
  %2079 = vmatprep.subr.bf16.mxu0 0
  %2080 = vmatpush1.bf16.msra.mxu0 0
  %2081 = vmatprep.subr.bf16.mxu0 0
  %2082 = vmatpush1.bf16.msra.mxu0 0
  %2083 = vmatprep.subr.bf16.mxu0 0
  %2084 = vmatpush1.bf16.msra.mxu0 0
  %2085 = vmatprep.subr.bf16.mxu0 0
  %2086 = vmatpush1.bf16.msra.mxu0 0
  %2087 = vmatprep.subr.bf16.mxu0 0
  %2088 = vmatpush1.bf16.msra.mxu0 0
  %2089 = vmatprep.subr.bf16.mxu0 0
  %2090 = vmatpush1.bf16.msra.mxu0 0
  %2091 = vmatprep.subr.bf16.mxu0 0
  %2092 = vmatpush1.bf16.msra.mxu0 0
  %2093 = vmatprep.subr.bf16.mxu0 0
  %2094 = vmatpush1.bf16.msra.mxu0 0
  %2095 = vmatprep.subr.bf16.mxu0 0
  %2096 = vmatpush1.bf16.msra.mxu0 0
  %2097 = vmatprep.subr.bf16.mxu0 0
  %2098 = vmatpush1.bf16.msra.mxu0 0
  %2099 = vmatprep.mubr.bf16.mxu0 0
  %2100 = vmatmul.mubr.bf16.gmra.mrb[0].mxu0 %v2065
  %v2101 = vpop.f32.mrb[0].mxu0
  %v2102 = vadd.f32 %v2059, %v2101
  %v2103 = vpop.f32.mrb[0].mxu0
  %v2104 = vpop.f32.mrb[0].mxu0
  %v2105 = vadd.f32 %v2060, %v2104
  %v2106 = vpop.f32.mrb[0].mxu0
  %2107 = vdwg.mxu0
  %v2108 = vadd.f32 %v2102, %v1329
  %v2109 = vadd.f32 %v2105, %v1329
  %v2110 = vxor.u32 %v2108, 2147483648
  %v2111 = vxor.u32 %v2109, 2147483648
  %v2112 = vmul.f32 %v2110, 1.442695
  %v2113 = vpow.pop %v2112
  %v2114 = vmul.f32 %v2111, 1.442695
  %v2115 = vpow.pop %v2114
  %v2116 = vadd.f32 %v2113, 1.0
  %v2117 = vadd.f32 %v2115, 1.0
  %v2118 = vrcp.pop %v2116
  %v2119 = vmul.f32 1.0, %v2118
  %v2120 = vrcp.pop %v2117
  %v2121 = vmul.f32 1.0, %v2120
  %v2122 = vtanh.pop %v2108
  %v2123 = vtanh.pop %v2109
  %v2124 = vmul.f32 %v2119, %v2033
  %v2125 = vmul.f32 %v2121, %v2034
  %2128 = vrot.lane.b32.xlu0 %v2122, 64
  %v2129 = vpop.permute.xlu0 %2128
  %2130 = vrot.lane.b32.xlu0 %v2123, 64
  %v2131 = vpop.permute.xlu0 %2130
  %v2134 = vmul.f32 %v2119, %v2129
  %v2135 = vmul.f32 %v2121, %v2131
  %2138 = vrot.lane.b32.xlu0 %v2134, 32
  %v2139 = vpop.permute.xlu0 %2138
  %2140 = vrot.lane.b32.xlu0 %v2135, 32
  %v2141 = vpop.permute.xlu0 %2140
  %v2144 = vadd.f32 %v2124, %v2139
  %v2145 = vadd.f32 %v2125, %v2141
  %v2146 = vtanh.pop %v2144
  %v2147 = vtanh.pop %v2145
  %2150 = vrot.lane.b32.xlu0 %v2146, 64
  %v2151 = vpop.permute.xlu0 %2150
  %2152 = vrot.lane.b32.xlu0 %v2147, 64
  %v2153 = vpop.permute.xlu0 %2152
  %v2156 = vmul.f32 %v2119, %v2151
  %v2157 = vmul.f32 %v2121, %v2153
  %2160 = vrot.lane.b32.xlu0 %v2156, 32
  %v2161 = vpop.permute.xlu0 %2160
  %2162 = vrot.lane.b32.xlu0 %v2157, 32
  %v2163 = vpop.permute.xlu0 %2162
  %2166 = vst.msk [vmem:[%s5 + $0x70] sm:$0xff] %vm96, %v2161
  %2167 = vst.msk [vmem:[%s5 + $0x78] sm:$0xff] %vm96, %v2163
  %s2168 = scalar_lea.vmem %s6, 16
  %2169 = vst.msk [vmem:[%s2168] sm:$0xff] %vm96, %v2161
  %2170 = vst.msk [vmem:[%s2168 + $0x8] sm:$0xff] %vm96, %v2163
  %2173 = vrot.lane.b32.xlu0 %v2144, 96
  %v2174 = vpop.permute.xlu0 %2173
  %2175 = vrot.lane.b32.xlu0 %v2145, 96
  %v2176 = vpop.permute.xlu0 %2175
  %s2179 = scalar_lea.vmem %s7, 16
  %2180 = vst.msk [vmem:[%s2179] sm:$0xff] %vm96, %v2174
  %2181 = vst.msk [vmem:[%s2179 + $0x8] sm:$0xff] %vm96, %v2176
  // Predicated region
  $region22: #{encoder_forward.1} parent=0 // pred_check
    _
  $region23: #{encoder_forward.1} parent=0 // pred_check_branch
    %2183 = sbr.rel (0) target = $region25
  $region24: #{encoder_forward.1} parent=0 // pred_region
    _
  $region25: #{encoder_forward.1} parent=0 // pred_fallthru
    _
  // Predicated region
  $region26: #{encoder_forward.1} parent=0 // pred_check
    _
  $region27: #{encoder_forward.1} parent=0 // pred_check_branch
    %2185 = sbr.rel (0) target = $region29
  $region28: #{encoder_forward.1} parent=0 // pred_region
    _
  $region29: #{encoder_forward.1} parent=0 // pred_fallthru
    _
  // Predicated region
  $region30: #{encoder_forward.1} parent=0 // pred_check
    _
  $region31: #{encoder_forward.1} parent=0 // pred_check_branch
    %2187 = sbr.rel (0) target = $region33
  $region32: #{encoder_forward.1} parent=0 // pred_region
    _
  $region33: #{encoder_forward.1} parent=0 // pred_fallthru
    _
  // Predicated region
  $region34: #{encoder_forward.1} parent=0 // pred_check
    _
  $region35: #{encoder_forward.1} parent=0 // pred_check_branch
    %2189 = sbr.rel (0) target = $region37
  $region36: #{encoder_forward.1} parent=0 // pred_region
    _
  $region37: #{encoder_forward.1} parent=0 // pred_fallthru
    _
  // Predicated region
  $region38: #{encoder_forward.1} parent=0 // pred_check
    _
  $region39: #{encoder_forward.1} parent=0 // pred_check_branch
    %2191 = sbr.rel (0) target = $region41
  $region40: #{encoder_forward.1} parent=0 // pred_region
    _
  $region41: #{encoder_forward.1} parent=0 // pred_fallthru
    _
  // Predicated region
  $region42: #{encoder_forward.1} parent=0 // pred_check
    _
  $region43: #{encoder_forward.1} parent=0 // pred_check_branch
    %2193 = sbr.rel (0) target = $region45
  $region44: #{encoder_forward.1} parent=0 // pred_region
    _
  $region45: #{encoder_forward.1} parent=0 // pred_fallthru
    _

</llo_original>
